<compile_context>
chip_gen: v6e
topology: v6e:2x2x1
jax: 0.10.0
libtpu: 0.0.40
codegen_flags: <defaults>
</compile_context>

<pallas_src>
import functools
import math

import jax
import jax.numpy as jnp
from jax.experimental import pallas as pl
from jax.experimental.pallas import tpu as pltpu


def _sphere_block_kernel(x_ref, top_ref, bot_ref, wf_ref, bconv_ref, wsc_ref,
                         bsc_ref, out_ref, *, th, w, cout):
    """Fused per-(batch, H-tile): 3x3 modulated conv (9 tap matmuls) + bias
    + LeakyReLU_n + 1x1 skip conv + residual, emitted channels-first.

    Block shapes:
      x_ref    : (1, TH, W, Cin)  bf16   main rows of this H tile (NHWC)
      top_ref  : (1, 1,  W, Cin)  bf16   clamped row above (replicate-H halo)
      bot_ref  : (1, 1,  W, Cin)  bf16   clamped row below
      wf_ref   : (1, 9, Cout, Cin) bf16  per-sample modulated+demodulated w
      bconv_ref: (Cout, 1) f32
      wsc_ref  : (Cout, Cin) bf16        1x1 skip conv weight
      bsc_ref  : (Cout, 1) f32
      out_ref  : (1, Cout, TH*W) f32     NCHW-flat tile (lanes = TH*W)
    """
    cin = x_ref.shape[-1]
    s = th * w

    main = x_ref[0]                                     # (TH, W, Cin)
    top = top_ref[0]                                    # (1,  W, Cin)
    bot = bot_ref[0]                                    # (1,  W, Cin)
    win = jnp.concatenate([top, main, bot], axis=0)     # (TH+2, W, Cin)

    # Circular padding along W (longitude) realized as two 1-column rotations.
    win_m = jnp.concatenate([win[:, -1:, :], win[:, :-1, :]], axis=1)  # x[w-1]
    win_p = jnp.concatenate([win[:, 1:, :], win[:, :1, :]], axis=1)    # x[w+1]

    # Flatten rows once per W-shift; tap slices below are then contiguous,
    # sublane-aligned row ranges (no per-tap relayout).
    flats = [v.reshape((th + 2) * w, cin) for v in (win_m, win, win_p)]

    dn = (((1,), (1,)), ((), ()))                       # contract Cin with Cin
    acc = jnp.zeros((cout, s), jnp.float32)
    for kh in range(3):
        for kw in range(3):
            x_tap = flats[kw][kh * w: kh * w + s]       # (S, Cin) bf16
            acc = acc + jax.lax.dot_general(
                wf_ref[0, kh * 3 + kw], x_tap, dn,
                preferred_element_type=jnp.float32)     # (Cout, S)

    # 1x1 skip conv on the un-shifted center tap (reuses the resident tile).
    x_center = flats[1][w: w + s]                       # (S, Cin) bf16
    skip = jax.lax.dot_general(wsc_ref[...], x_center, dn,
                               preferred_element_type=jnp.float32)

    conv = acc + bconv_ref[...]                         # (Cout, S) + (Cout, 1)
    act = jnp.where(conv >= 0.0, conv, 0.2 * conv) * jnp.float32(math.sqrt(2.0))
    out_ref[0] = (act + skip + bsc_ref[...]).astype(out_ref.dtype)


def _choose_tile_h(h, w, cin, cout):
    """Largest H tile that keeps TH*W a multiple of 128 (lane-dense output)
    and keeps per-block VMEM usage comfortably small (v7x has 64 MiB)."""
    budget = 2 * 1024 * 1024
    divisors = [d for d in range(1, h + 1) if h % d == 0]
    legal = [d for d in divisors if (d * w) % 128 == 0] or [h]
    fitting = [d for d in legal
               if d * w * cin * 2 <= budget and d * w * cout * 4 <= 4 * budget]
    return max(fitting) if fitting else min(legal)


def init_params(key, local_dim, global_dim):
    k1, k2, k3, k4 = jax.random.split(key, 4)
    cin = cout = local_dim
    params = {
        # EqualLinear for style modulation (bias init = 1.0 as in StyleGAN2).
        "w_style": jax.random.normal(k1, (global_dim, cin), jnp.float32),
        "b_style": jnp.ones((cin,), jnp.float32),
        # Modulated 3x3 conv weight / bias.
        "w_conv": jax.random.normal(k2, (cout, cin, 3, 3), jnp.float32),
        "b_conv": jnp.zeros((cout,), jnp.float32),
        # 1x1 skip conv (nn.Conv2d(local_dim, local_dim, 1)).
        "w_sc": jax.random.normal(k3, (cout, cin), jnp.float32) / math.sqrt(cin),
        "b_sc": 0.01 * jax.random.normal(k4, (cout,), jnp.float32),
    }
    return params


def sphere_conditional_block(params, x, cond, coords=None, coords_partial=None,
                             noise=None, tile_h=None):
    """Forward pass. x: (B, local_dim, H, W) NCHW; cond: (B, global_dim).

    Returns (out, flops) mirroring the PyTorch module (flops = 0).
    """
    del coords, coords_partial, noise  # noise disabled; no coord concat in this config
    b, cin, h, w = x.shape
    cout = params["w_conv"].shape[0]
    gdim = params["w_style"].shape[0]

    # ---- glue: per-sample modulation / demodulation (tiny, stays in JAX) ----
    style = cond @ (params["w_style"] / math.sqrt(gdim)) + params["b_style"]
    w_scaled = params["w_conv"] * (1.0 / math.sqrt(cin * 9))      # (Cout,Cin,3,3)
    w_mod = w_scaled[None] * style[:, None, :, None, None]        # (B,Cout,Cin,3,3)
    demod = jax.lax.rsqrt(
        jnp.sum(w_mod * w_mod, axis=(2, 3, 4), keepdims=True) + 1e-8)
    w_f = (w_mod * demod).transpose(0, 3, 4, 1, 2).reshape(b, 9, cout, cin)
    w_f = w_f.astype(jnp.bfloat16)                                # MXU operand

    w_sc = params["w_sc"].astype(jnp.bfloat16)                    # (Cout, Cin)
    b_conv = params["b_conv"].reshape(cout, 1).astype(jnp.float32)
    b_sc = params["b_sc"].reshape(cout, 1).astype(jnp.float32)

    # ---- glue: single host pass over x (NCHW -> NHWC + bf16 cast) -----------
    x_nhwc = x.transpose(0, 2, 3, 1).astype(jnp.bfloat16)         # (B, H, W, Cin)

    th = tile_h if tile_h is not None else _choose_tile_h(h, w, cin, cout)
    assert h % th == 0, "tile_h must divide H"
    assert (th * w) % 128 == 0 or th == h, "H tile must keep TH*W lane-aligned"
    n_ht = h // th
    s = th * w

    kernel = functools.partial(_sphere_block_kernel, th=th, w=w, cout=cout)

    # ---- Pallas kernel: hot path --------------------------------------------
    out_flat = pl.pallas_call(
        kernel,
        out_shape=jax.ShapeDtypeStruct((b, cout, h * w), jnp.float32),
        grid=(b, n_ht),
        in_specs=[
            # main rows of the tile
            pl.BlockSpec((1, th, w, cin), lambda bi, ti: (bi, ti, 0, 0)),
            # replicate-H halo rows via clamped index maps (no host padding)
            pl.BlockSpec((1, 1, w, cin),
                         lambda bi, ti: (bi, jnp.maximum(ti * th - 1, 0), 0, 0)),
            pl.BlockSpec((1, 1, w, cin),
                         lambda bi, ti: (bi, jnp.minimum(ti * th + th, h - 1), 0, 0)),
            # per-sample modulated weights, biases, skip-conv weight
            pl.BlockSpec((1, 9, cout, cin), lambda bi, ti: (bi, 0, 0, 0)),
            pl.BlockSpec((cout, 1), lambda bi, ti: (0, 0)),
            pl.BlockSpec((cout, cin), lambda bi, ti: (0, 0)),
            pl.BlockSpec((cout, 1), lambda bi, ti: (0, 0)),
        ],
        out_specs=pl.BlockSpec((1, cout, s), lambda bi, ti: (bi, 0, ti)),
        compiler_params=pltpu.CompilerParams(
            dimension_semantics=("parallel", "parallel"),
            vmem_limit_bytes=32 * 1024 * 1024),
    )(x_nhwc, x_nhwc, x_nhwc, w_f, b_conv, w_sc, b_sc)

    out = out_flat.reshape(b, cout, h, w)     # contiguous -> free, stays NCHW
    return out, 0


def _reference(params, x, cond):
    """Pure-JAX f32 reference of the same math (for sanity checking)."""
    b, cin, h, w = x.shape
    cout = params["w_conv"].shape[0]
    gdim = params["w_style"].shape[0]
    style = cond @ (params["w_style"] / math.sqrt(gdim)) + params["b_style"]
    w_scaled = params["w_conv"] / math.sqrt(cin * 9)
    w_mod = w_scaled[None] * style[:, None, :, None, None]
    demod = 1.0 / jnp.sqrt(jnp.sum(w_mod ** 2, axis=(2, 3, 4), keepdims=True) + 1e-8)
    w_f = w_mod * demod                                           # (B,Cout,Cin,3,3)
    xp = jnp.pad(x, ((0, 0), (0, 0), (1, 1), (0, 0)), mode="edge")   # latitude
    xp = jnp.pad(xp, ((0, 0), (0, 0), (0, 0), (1, 1)), mode="wrap")  # longitude
    conv = jnp.zeros((b, cout, h, w), jnp.float32)
    for kh in range(3):
        for kw in range(3):
            conv = conv + jnp.einsum("bchw,boc->bohw",
                                     xp[:, :, kh:kh + h, kw:kw + w],
                                     w_f[:, :, :, kh, kw])
    conv = conv + params["b_conv"][None, :, None, None]
    act = jnp.where(conv >= 0, conv, 0.2 * conv) * (2.0 ** 0.5)
    skip = (jnp.einsum("bchw,oc->bohw", x, params["w_sc"])
            + params["b_sc"][None, :, None, None])
    return act + skip


if __name__ == "__main__":
    # Small, config-consistent shapes: local_dim=8, global_dim=16, H=W=16, B=2.
    # NOTE (perf review): these toy shapes are grid-overhead-bound; tuning
    # (tile_h, dtypes) must be redone at production H, W, local_latent_dim.
    B, LOCAL_DIM, GLOBAL_DIM, COORD_NUM_DIR, H, W = 2, 8, 16, 3, 16, 16

    key = jax.random.PRNGKey(0)
    kp, kx, kc, kcoord = jax.random.split(key, 4)
    params = init_params(kp, LOCAL_DIM, GLOBAL_DIM)

    x = jax.random.normal(kx, (B, LOCAL_DIM, H, W), jnp.float32)
    cond = jax.random.normal(kc, (B, GLOBAL_DIM), jnp.float32)
    coords = jax.random.normal(kcoord, (B, COORD_NUM_DIR, H, W), jnp.float32)

    # tile_h=8 -> 2 H-tiles per sample, exercising the halo + multi-tile path.
    out, flops = sphere_conditional_block(params, x, cond, coords=coords,
                                          coords_partial=None, noise=None,
                                          tile_h=8)
    out = jax.block_until_ready(out)

    ref = _reference(params, x, cond)
    assert out.shape == (B, LOCAL_DIM, H, W)
    # bf16 MXU operands -> compare against the f32 reference with a loose but
    # structure-revealing tolerance.
    assert jnp.allclose(out, ref, atol=1e-1, rtol=5e-2), "mismatch vs JAX reference"

    print("KERNEL_OK")
</pallas_src>

<mosaic_0001>
module attributes {stable_mosaic.version = 11 : i64} {
  func.func @_sphere_block_kernel(%arg0: i32, %arg1: i32, %arg2: memref<1x8x16x8xbf16, #tpu.memory_space<vmem>>, %arg3: memref<1x1x16x8xbf16, #tpu.memory_space<vmem>>, %arg4: memref<1x1x16x8xbf16, #tpu.memory_space<vmem>>, %arg5: memref<1x9x8x8xbf16, #tpu.memory_space<vmem>>, %arg6: memref<8x1xf32, #tpu.memory_space<vmem>>, %arg7: memref<8x8xbf16, #tpu.memory_space<vmem>>, %arg8: memref<8x1xf32, #tpu.memory_space<vmem>>, %arg9: memref<1x8x128xf32, #tpu.memory_space<vmem>>) attributes {dimension_semantics = [#tpu.dimension_semantics<parallel>, #tpu.dimension_semantics<parallel>], iteration_bounds = array<i64: 2, 2>, scalar_prefetch = 0 : i64, scratch_operands = 0 : i64, tpu.core_type = #tpu.core_type<tc>, window_params = [{transform_indices = @transform_0, window_bounds = array<i64: 1, 8, 16, 8>}, {transform_indices = @transform_1, window_bounds = array<i64: 1, 1, 16, 8>}, {transform_indices = @transform_2, window_bounds = array<i64: 1, 1, 16, 8>}, {transform_indices = @transform_3, window_bounds = array<i64: 1, 9, 8, 8>}, {pipeline_mode = #tpu.pipeline_mode<synchronous>, transform_indices = @transform_4, window_bounds = array<i64: 8, 1>}, {pipeline_mode = #tpu.pipeline_mode<synchronous>, transform_indices = @transform_5, window_bounds = array<i64: 8, 8>}, {pipeline_mode = #tpu.pipeline_mode<synchronous>, transform_indices = @transform_6, window_bounds = array<i64: 8, 1>}, {transform_indices = @transform_7, window_bounds = array<i64: 1, 8, 128>}]} {
    %c0 = arith.constant 0 : index
    %c0_0 = arith.constant 0 : index
    %c0_1 = arith.constant 0 : index
    %c0_2 = arith.constant 0 : index
    %0 = vector.load %arg2[%c0, %c0_0, %c0_1, %c0_2] : memref<1x8x16x8xbf16, #tpu.memory_space<vmem>>, vector<1x8x16x8xbf16>
    %1 = vector.shape_cast %0 : vector<1x8x16x8xbf16> to vector<8x16x8xbf16>
    %c0_3 = arith.constant 0 : index
    %c0_4 = arith.constant 0 : index
    %c0_5 = arith.constant 0 : index
    %c0_6 = arith.constant 0 : index
    %2 = vector.load %arg3[%c0_3, %c0_4, %c0_5, %c0_6] : memref<1x1x16x8xbf16, #tpu.memory_space<vmem>>, vector<1x1x16x8xbf16>
    %3 = vector.shape_cast %2 : vector<1x1x16x8xbf16> to vector<1x16x8xbf16>
    %c0_7 = arith.constant 0 : index
    %c0_8 = arith.constant 0 : index
    %c0_9 = arith.constant 0 : index
    %c0_10 = arith.constant 0 : index
    %4 = vector.load %arg4[%c0_7, %c0_8, %c0_9, %c0_10] : memref<1x1x16x8xbf16, #tpu.memory_space<vmem>>, vector<1x1x16x8xbf16>
    %5 = vector.shape_cast %4 : vector<1x1x16x8xbf16> to vector<1x16x8xbf16>
    %6 = tpu.concatenate %3, %1, %5 in 0 : vector<1x16x8xbf16>, vector<8x16x8xbf16>, vector<1x16x8xbf16> -> vector<10x16x8xbf16>
    %7 = vector.extract_strided_slice %6 {offsets = [0, 15, 0], sizes = [10, 1, 8], strides = [1, 1, 1]} : vector<10x16x8xbf16> to vector<10x1x8xbf16>
    %8 = vector.extract_strided_slice %6 {offsets = [0, 0, 0], sizes = [10, 15, 8], strides = [1, 1, 1]} : vector<10x16x8xbf16> to vector<10x15x8xbf16>
    %9 = tpu.concatenate %7, %8 in 1 : vector<10x1x8xbf16>, vector<10x15x8xbf16> -> vector<10x16x8xbf16>
    %10 = vector.extract_strided_slice %6 {offsets = [0, 1, 0], sizes = [10, 15, 8], strides = [1, 1, 1]} : vector<10x16x8xbf16> to vector<10x15x8xbf16>
    %11 = vector.extract_strided_slice %6 {offsets = [0, 0, 0], sizes = [10, 1, 8], strides = [1, 1, 1]} : vector<10x16x8xbf16> to vector<10x1x8xbf16>
    %12 = tpu.concatenate %10, %11 in 1 : vector<10x15x8xbf16>, vector<10x1x8xbf16> -> vector<10x16x8xbf16>
    %13 = vector.shape_cast %9 : vector<10x16x8xbf16> to vector<160x8xbf16>
    %14 = vector.shape_cast %6 : vector<10x16x8xbf16> to vector<160x8xbf16>
    %15 = vector.shape_cast %12 : vector<10x16x8xbf16> to vector<160x8xbf16>
    %cst = arith.constant 0.000000e+00 : f32
    %16 = vector.broadcast %cst : f32 to vector<8x128xf32>
    %17 = vector.extract_strided_slice %13 {offsets = [0, 0], sizes = [128, 8], strides = [1, 1]} : vector<160x8xbf16> to vector<128x8xbf16>
    %c0_11 = arith.constant 0 : index
    %c0_12 = arith.constant 0 : index
    %c0_13 = arith.constant 0 : index
    %c0_14 = arith.constant 0 : index
    %18 = vector.load %arg5[%c0_11, %c0_12, %c0_13, %c0_14] : memref<1x9x8x8xbf16, #tpu.memory_space<vmem>>, vector<1x1x8x8xbf16>
    %19 = vector.shape_cast %18 : vector<1x1x8x8xbf16> to vector<8x8xbf16>
    %cst_15 = arith.constant dense<0.000000e+00> : vector<8x128xf32>
    %20 = tpu.matmul %19, %17, %cst_15 {dimension_numbers = #tpu.dot_dimension_numbers<[1], [1], [0], [0], [0, 0, 1, 0], [], []>} : vector<8x8xbf16>, vector<128x8xbf16>, vector<8x128xf32> -> vector<8x128xf32>
    %21 = arith.addf %16, %20 : vector<8x128xf32>
    %22 = vector.extract_strided_slice %14 {offsets = [0, 0], sizes = [128, 8], strides = [1, 1]} : vector<160x8xbf16> to vector<128x8xbf16>
    %c0_16 = arith.constant 0 : index
    %c1 = arith.constant 1 : index
    %c0_17 = arith.constant 0 : index
    %c0_18 = arith.constant 0 : index
    %23 = vector.load %arg5[%c0_16, %c1, %c0_17, %c0_18] : memref<1x9x8x8xbf16, #tpu.memory_space<vmem>>, vector<1x1x8x8xbf16>
    %24 = vector.shape_cast %23 : vector<1x1x8x8xbf16> to vector<8x8xbf16>
    %cst_19 = arith.constant dense<0.000000e+00> : vector<8x128xf32>
    %25 = tpu.matmul %24, %22, %cst_19 {dimension_numbers = #tpu.dot_dimension_numbers<[1], [1], [0], [0], [0, 0, 1, 0], [], []>} : vector<8x8xbf16>, vector<128x8xbf16>, vector<8x128xf32> -> vector<8x128xf32>
    %26 = arith.addf %21, %25 : vector<8x128xf32>
    %27 = vector.extract_strided_slice %15 {offsets = [0, 0], sizes = [128, 8], strides = [1, 1]} : vector<160x8xbf16> to vector<128x8xbf16>
    %c0_20 = arith.constant 0 : index
    %c2 = arith.constant 2 : index
    %c0_21 = arith.constant 0 : index
    %c0_22 = arith.constant 0 : index
    %28 = vector.load %arg5[%c0_20, %c2, %c0_21, %c0_22] : memref<1x9x8x8xbf16, #tpu.memory_space<vmem>>, vector<1x1x8x8xbf16>
    %29 = vector.shape_cast %28 : vector<1x1x8x8xbf16> to vector<8x8xbf16>
    %cst_23 = arith.constant dense<0.000000e+00> : vector<8x128xf32>
    %30 = tpu.matmul %29, %27, %cst_23 {dimension_numbers = #tpu.dot_dimension_numbers<[1], [1], [0], [0], [0, 0, 1, 0], [], []>} : vector<8x8xbf16>, vector<128x8xbf16>, vector<8x128xf32> -> vector<8x128xf32>
    %31 = arith.addf %26, %30 : vector<8x128xf32>
    %32 = vector.extract_strided_slice %13 {offsets = [16, 0], sizes = [128, 8], strides = [1, 1]} : vector<160x8xbf16> to vector<128x8xbf16>
    %c0_24 = arith.constant 0 : index
    %c3 = arith.constant 3 : index
    %c0_25 = arith.constant 0 : index
    %c0_26 = arith.constant 0 : index
    %33 = vector.load %arg5[%c0_24, %c3, %c0_25, %c0_26] : memref<1x9x8x8xbf16, #tpu.memory_space<vmem>>, vector<1x1x8x8xbf16>
    %34 = vector.shape_cast %33 : vector<1x1x8x8xbf16> to vector<8x8xbf16>
    %cst_27 = arith.constant dense<0.000000e+00> : vector<8x128xf32>
    %35 = tpu.matmul %34, %32, %cst_27 {dimension_numbers = #tpu.dot_dimension_numbers<[1], [1], [0], [0], [0, 0, 1, 0], [], []>} : vector<8x8xbf16>, vector<128x8xbf16>, vector<8x128xf32> -> vector<8x128xf32>
    %36 = arith.addf %31, %35 : vector<8x128xf32>
    %37 = vector.extract_strided_slice %14 {offsets = [16, 0], sizes = [128, 8], strides = [1, 1]} : vector<160x8xbf16> to vector<128x8xbf16>
    %c0_28 = arith.constant 0 : index
    %c4 = arith.constant 4 : index
    %c0_29 = arith.constant 0 : index
    %c0_30 = arith.constant 0 : index
    %38 = vector.load %arg5[%c0_28, %c4, %c0_29, %c0_30] : memref<1x9x8x8xbf16, #tpu.memory_space<vmem>>, vector<1x1x8x8xbf16>
    %39 = vector.shape_cast %38 : vector<1x1x8x8xbf16> to vector<8x8xbf16>
    %cst_31 = arith.constant dense<0.000000e+00> : vector<8x128xf32>
    %40 = tpu.matmul %39, %37, %cst_31 {dimension_numbers = #tpu.dot_dimension_numbers<[1], [1], [0], [0], [0, 0, 1, 0], [], []>} : vector<8x8xbf16>, vector<128x8xbf16>, vector<8x128xf32> -> vector<8x128xf32>
    %41 = arith.addf %36, %40 : vector<8x128xf32>
    %42 = vector.extract_strided_slice %15 {offsets = [16, 0], sizes = [128, 8], strides = [1, 1]} : vector<160x8xbf16> to vector<128x8xbf16>
    %c0_32 = arith.constant 0 : index
    %c5 = arith.constant 5 : index
    %c0_33 = arith.constant 0 : index
    %c0_34 = arith.constant 0 : index
    %43 = vector.load %arg5[%c0_32, %c5, %c0_33, %c0_34] : memref<1x9x8x8xbf16, #tpu.memory_space<vmem>>, vector<1x1x8x8xbf16>
    %44 = vector.shape_cast %43 : vector<1x1x8x8xbf16> to vector<8x8xbf16>
    %cst_35 = arith.constant dense<0.000000e+00> : vector<8x128xf32>
    %45 = tpu.matmul %44, %42, %cst_35 {dimension_numbers = #tpu.dot_dimension_numbers<[1], [1], [0], [0], [0, 0, 1, 0], [], []>} : vector<8x8xbf16>, vector<128x8xbf16>, vector<8x128xf32> -> vector<8x128xf32>
    %46 = arith.addf %41, %45 : vector<8x128xf32>
    %47 = vector.extract_strided_slice %13 {offsets = [32, 0], sizes = [128, 8], strides = [1, 1]} : vector<160x8xbf16> to vector<128x8xbf16>
    %c0_36 = arith.constant 0 : index
    %c6 = arith.constant 6 : index
    %c0_37 = arith.constant 0 : index
    %c0_38 = arith.constant 0 : index
    %48 = vector.load %arg5[%c0_36, %c6, %c0_37, %c0_38] : memref<1x9x8x8xbf16, #tpu.memory_space<vmem>>, vector<1x1x8x8xbf16>
    %49 = vector.shape_cast %48 : vector<1x1x8x8xbf16> to vector<8x8xbf16>
    %cst_39 = arith.constant dense<0.000000e+00> : vector<8x128xf32>
    %50 = tpu.matmul %49, %47, %cst_39 {dimension_numbers = #tpu.dot_dimension_numbers<[1], [1], [0], [0], [0, 0, 1, 0], [], []>} : vector<8x8xbf16>, vector<128x8xbf16>, vector<8x128xf32> -> vector<8x128xf32>
    %51 = arith.addf %46, %50 : vector<8x128xf32>
    %52 = vector.extract_strided_slice %14 {offsets = [32, 0], sizes = [128, 8], strides = [1, 1]} : vector<160x8xbf16> to vector<128x8xbf16>
    %c0_40 = arith.constant 0 : index
    %c7 = arith.constant 7 : index
    %c0_41 = arith.constant 0 : index
    %c0_42 = arith.constant 0 : index
    %53 = vector.load %arg5[%c0_40, %c7, %c0_41, %c0_42] : memref<1x9x8x8xbf16, #tpu.memory_space<vmem>>, vector<1x1x8x8xbf16>
    %54 = vector.shape_cast %53 : vector<1x1x8x8xbf16> to vector<8x8xbf16>
    %cst_43 = arith.constant dense<0.000000e+00> : vector<8x128xf32>
    %55 = tpu.matmul %54, %52, %cst_43 {dimension_numbers = #tpu.dot_dimension_numbers<[1], [1], [0], [0], [0, 0, 1, 0], [], []>} : vector<8x8xbf16>, vector<128x8xbf16>, vector<8x128xf32> -> vector<8x128xf32>
    %56 = arith.addf %51, %55 : vector<8x128xf32>
    %57 = vector.extract_strided_slice %15 {offsets = [32, 0], sizes = [128, 8], strides = [1, 1]} : vector<160x8xbf16> to vector<128x8xbf16>
    %c0_44 = arith.constant 0 : index
    %c8 = arith.constant 8 : index
    %c0_45 = arith.constant 0 : index
    %c0_46 = arith.constant 0 : index
    %58 = vector.load %arg5[%c0_44, %c8, %c0_45, %c0_46] : memref<1x9x8x8xbf16, #tpu.memory_space<vmem>>, vector<1x1x8x8xbf16>
    %59 = vector.shape_cast %58 : vector<1x1x8x8xbf16> to vector<8x8xbf16>
    %cst_47 = arith.constant dense<0.000000e+00> : vector<8x128xf32>
    %60 = tpu.matmul %59, %57, %cst_47 {dimension_numbers = #tpu.dot_dimension_numbers<[1], [1], [0], [0], [0, 0, 1, 0], [], []>} : vector<8x8xbf16>, vector<128x8xbf16>, vector<8x128xf32> -> vector<8x128xf32>
    %61 = arith.addf %56, %60 : vector<8x128xf32>
    %62 = vector.extract_strided_slice %14 {offsets = [16, 0], sizes = [128, 8], strides = [1, 1]} : vector<160x8xbf16> to vector<128x8xbf16>
    %c0_48 = arith.constant 0 : index
    %c0_49 = arith.constant 0 : index
    %63 = vector.load %arg7[%c0_48, %c0_49] : memref<8x8xbf16, #tpu.memory_space<vmem>>, vector<8x8xbf16>
    %cst_50 = arith.constant dense<0.000000e+00> : vector<8x128xf32>
    %64 = tpu.matmul %63, %62, %cst_50 {dimension_numbers = #tpu.dot_dimension_numbers<[1], [1], [0], [0], [0, 0, 1, 0], [], []>} : vector<8x8xbf16>, vector<128x8xbf16>, vector<8x128xf32> -> vector<8x128xf32>
    %c0_51 = arith.constant 0 : index
    %c0_52 = arith.constant 0 : index
    %65 = vector.load %arg6[%c0_51, %c0_52] : memref<8x1xf32, #tpu.memory_space<vmem>>, vector<8x1xf32>
    %66 = vector.broadcast %65 : vector<8x1xf32> to vector<8x128xf32>
    %67 = arith.addf %61, %66 : vector<8x128xf32>
    %cst_53 = arith.constant 0.000000e+00 : f32
    %68 = vector.broadcast %cst_53 : f32 to vector<8x128xf32>
    %69 = arith.cmpf oge, %67, %68 : vector<8x128xf32>
    %cst_54 = arith.constant 2.000000e-01 : f32
    %70 = vector.broadcast %cst_54 : f32 to vector<8x128xf32>
    %71 = arith.mulf %70, %67 : vector<8x128xf32>
    %72 = arith.select %69, %67, %71 : vector<8x128xi1>, vector<8x128xf32>
    %cst_55 = arith.constant 1.41421354 : f32
    %73 = vector.broadcast %cst_55 : f32 to vector<8x128xf32>
    %74 = arith.mulf %72, %73 : vector<8x128xf32>
    %75 = arith.addf %74, %64 : vector<8x128xf32>
    %c0_56 = arith.constant 0 : index
    %c0_57 = arith.constant 0 : index
    %76 = vector.load %arg8[%c0_56, %c0_57] : memref<8x1xf32, #tpu.memory_space<vmem>>, vector<8x1xf32>
    %77 = vector.broadcast %76 : vector<8x1xf32> to vector<8x128xf32>
    %78 = arith.addf %75, %77 : vector<8x128xf32>
    %c0_58 = arith.constant 0 : index
    %c0_59 = arith.constant 0 : index
    %c0_60 = arith.constant 0 : index
    %79 = vector.load %arg9[%c0_58, %c0_59, %c0_60] : memref<1x8x128xf32, #tpu.memory_space<vmem>>, vector<1x8x128xf32>
    %80 = vector.shape_cast %79 : vector<1x8x128xf32> to vector<8x128xf32>
    %81 = vector.shape_cast %78 : vector<8x128xf32> to vector<1x8x128xf32>
    tpu.vector_store %arg9[%c0_58, %c0_59, %c0_60], %81 {strides = array<i32>} : memref<1x8x128xf32, #tpu.memory_space<vmem>>, vector<1x8x128xf32>,
    return
  }
  func.func @transform_0(%arg0: i32, %arg1: i32) -> (i32, i32, i32, i32) {
    %c0_i32 = arith.constant 0 : i32
    %c0_i32_0 = arith.constant 0 : i32
    %c0_i32_1 = arith.constant 0 : i32
    return %arg0, %arg1, %c0_i32, %c0_i32_0 : i32, i32, i32, i32
  }
  func.func @transform_1(%arg0: i32, %arg1: i32) -> (i32, i32, i32, i32) {
    %c8_i32 = arith.constant 8 : i32
    %0 = arith.muli %arg1, %c8_i32 : i32
    %c1_i32 = arith.constant 1 : i32
    %1 = arith.subi %0, %c1_i32 : i32
    %c0_i32 = arith.constant 0 : i32
    %2 = arith.maxsi %1, %c0_i32 : i32
    %c0_i32_0 = arith.constant 0 : i32
    %c0_i32_1 = arith.constant 0 : i32
    %c0_i32_2 = arith.constant 0 : i32
    return %arg0, %2, %c0_i32_0, %c0_i32_1 : i32, i32, i32, i32
  }
  func.func @transform_2(%arg0: i32, %arg1: i32) -> (i32, i32, i32, i32) {
    %c8_i32 = arith.constant 8 : i32
    %0 = arith.muli %arg1, %c8_i32 : i32
    %c8_i32_0 = arith.constant 8 : i32
    %1 = arith.addi %0, %c8_i32_0 : i32
    %c15_i32 = arith.constant 15 : i32
    %2 = arith.minsi %1, %c15_i32 : i32
    %c0_i32 = arith.constant 0 : i32
    %c0_i32_1 = arith.constant 0 : i32
    %c0_i32_2 = arith.constant 0 : i32
    return %arg0, %2, %c0_i32, %c0_i32_1 : i32, i32, i32, i32
  }
  func.func @transform_3(%arg0: i32, %arg1: i32) -> (i32, i32, i32, i32) {
    %c0_i32 = arith.constant 0 : i32
    %c0_i32_0 = arith.constant 0 : i32
    %c0_i32_1 = arith.constant 0 : i32
    %c0_i32_2 = arith.constant 0 : i32
    return %arg0, %c0_i32, %c0_i32_0, %c0_i32_1 : i32, i32, i32, i32
  }
  func.func @transform_4(%arg0: i32, %arg1: i32) -> (i32, i32) {
    %c0_i32 = arith.constant 0 : i32
    %c0_i32_0 = arith.constant 0 : i32
    %c0_i32_1 = arith.constant 0 : i32
    return %c0_i32, %c0_i32_0 : i32, i32
  }
  func.func @transform_5(%arg0: i32, %arg1: i32) -> (i32, i32) {
    %c0_i32 = arith.constant 0 : i32
    %c0_i32_0 = arith.constant 0 : i32
    %c0_i32_1 = arith.constant 0 : i32
    return %c0_i32, %c0_i32_0 : i32, i32
  }
  func.func @transform_6(%arg0: i32, %arg1: i32) -> (i32, i32) {
    %c0_i32 = arith.constant 0 : i32
    %c0_i32_0 = arith.constant 0 : i32
    %c0_i32_1 = arith.constant 0 : i32
    return %c0_i32, %c0_i32_0 : i32, i32
  }
  func.func @transform_7(%arg0: i32, %arg1: i32) -> (i32, i32, i32) {
    %c0_i32 = arith.constant 0 : i32
    %c0_i32_0 = arith.constant 0 : i32
    return %arg0, %c0_i32, %arg1 : i32, i32, i32
  }
}

</mosaic_0001>

<llo_original>
// kernel: tpu_custom_call.1
$region0: #{tpu_custom_call.1}
  #allocation0 [shape = 'u32[]', space=smem, size = 0x4, offset = 0x4, fixed_abs, tag = 'smem constant byte address 0x4 - core index']
  #allocation1 [shape = 'u32[144,128]{1,0:T(1,128)}', space=vmem, size = 0x12000, scoped, tag = 'internal scratch']
  %s0 = inlined_call_operand.vmem [shape: bf16[2,16,16,8], index: 0, kind: input, shape index: {}]
  %s1 = inlined_call_operand.vmem [shape: bf16[2,16,16,8], index: 1, kind: input, shape index: {}]
  %s2 = inlined_call_operand.vmem [shape: bf16[2,16,16,8], index: 2, kind: input, shape index: {}]
  %s3 = inlined_call_operand.vmem [shape: bf16[2,9,8,8], index: 3, kind: input, shape index: {}]
  %s4 = inlined_call_operand.vmem [shape: f32[8,1], index: 4, kind: input, shape index: {}]
  %s5 = inlined_call_operand.vmem [shape: bf16[8,8], index: 5, kind: input, shape index: {}]
  %s6 = inlined_call_operand.vmem [shape: f32[8,1], index: 6, kind: input, shape index: {}]
  %s7 = inlined_call_operand.hbm [shape: f32[2,8,256], index: 7, kind: output, shape index: {}]
  %s8 = sld [smem:[#allocation0]]
  $region61: #{tpu_custom_call.1} parent=0
    _
  %s10 = ssub.s32 1, %s8
  %s11 = scalar_select 0, %s10, %s8
  $region1: #{tpu_custom_call.1} parent=0
    #allocation2 [shape = 'u8[8192]{0}', space=vmem, size = 0x2000, scoped, tag = 'output window, operand 0']
    #allocation3 [shape = 's32[2]{0}', space=sflag, size = 0x8, scoped, tag = 'scoped memory for tpu_custom_call.1']
    %12 = vsyncpa [#allocation3], 0
    %s13 = scalar_lea.sflag [#allocation3], 1
    %14 = vsyncpa %s13, 0
    loop: start=0, step=1, limit=6
    $region2: #{tpu_custom_call.1} parent=1 // loop_pre_header
      _
    $region3: #{tpu_custom_call.1} parent=1 // loop_header
      %s16 = sphi 0, %s20
      %p17 = scmp.ge.s32.totalorder %s16, 6
      %s23 = sphi 0, %s35
      %s24 = sphi 0, %s31
      %s25 = sphi 0, %s23
      %s26 = sphi 0, %s24
      %s27 = sphi 0, %s25
      %s28 = sphi 0, %s26
      %s40 = sphi 0, %s42
      %s43 = sphi 0, %s40
      %s44 = sphi 0, %s43
      %s60 = sphi 0, %s44
      %s76 = sphi 0, %s78
      %s79 = sphi 0, %s76
      %s80 = sphi 0, %s79
      %s96 = sphi 0, %s80
      %s112 = sphi 0, %s114
      %s115 = sphi 0, %s112
      %s116 = sphi 0, %s115
      %s132 = sphi 0, %s116
      %s138 = sphi 0, %s140
      %s141 = sphi 0, %s138
      %s142 = sphi 0, %s141
      %s158 = sphi 0, %s142
      %s162 = sphi 0, %s162
      %s164 = sphi 0, %s162
      %s165 = sphi 0, %s164
      %s179 = sphi 0, %s165
      %s183 = sphi 0, %s183
      %s185 = sphi 0, %s183
      %s186 = sphi 0, %s185
      %s200 = sphi 0, %s186
      %s204 = sphi 0, %s204
      %s206 = sphi 0, %s204
      %s207 = sphi 0, %s206
      %s221 = sphi 0, %s207
      %s229 = sphi 0, %s231
      %s232 = sphi 0, %s229
      %s233 = sphi 0, %s232
      %s249 = sphi 0, %s233
    $region4: #{tpu_custom_call.1} parent=1 // loop_header_branch
      %19 = sbr.rel (%p17) target = $region8
    $region5: #{tpu_custom_call.1} parent=1 // loop_body
      %s21 = ssub.s32 %s16, 1
      %s22 = ssub.s32 %s16, 2
      %s29 = sadd.s32 1, %s24
      %p30 = scmp.ge.s32.totalorder %s29, 2
      %s31 = scalar_select %p30, 0, %s29
      %s32 = sadd.s32 1, %s23
      %s33 = scalar_select %p30, %s32, %s23
      %p34 = scmp.ge.s32.totalorder %s33, 2
      %s35 = scalar_select %p34, 0, %s33
      %s36 = ssub.s32 %s23, %s35
      %s37 = ssub.s32 %s24, %s31
      %s38 = sor.u32 %s36, %s37
      %p39 = scmp.eq.s32.totalorder %s38, 0
      %s41 = sadd.s32 %s40, 1
      %s42 = scalar_select %p39, %s40, %s41
      %p45 = pneg %p39
      %p46 = scmp.eq.s32.totalorder %s16, 3
      %p47 = por %p45, %p46
      %p48 = scmp.ne.s32.totalorder %s40, %s43
      %p49 = scmp.eq.s32.totalorder %s16, 0
      %p50 = por %p48, %p49
      %p51 = scmp.ne.s32.totalorder %s40, %s43
      %p52 = scmp.eq.s32.totalorder %s21, 3
      %p53 = por %p51, %p52
      %p54 = scmp.ne.s32.totalorder %s43, %s44
      %p55 = scmp.eq.s32.totalorder %s21, 0
      %p56 = por %p54, %p55
      %p57 = scmp.ne.s32.totalorder %s43, %s44
      %p58 = scmp.eq.s32.totalorder %s22, 3
      %p59 = por %p57, %p58
      %p61 = scmp.ne.s32.totalorder %s44, %s60
      %p62 = scmp.eq.s32.totalorder %s22, 0
      %p63 = por %p61, %p62
      %s64 = smul.u32 %s24, 8
      %s65 = ssub.s32 %s64, 1
      %p66 = scmp.gt.s32.totalorder %s65, 0
      %s67 = scalar_select %p66, %s65, 0
      %s68 = smul.u32 %s31, 8
      %s69 = ssub.s32 %s68, 1
      %p70 = scmp.gt.s32.totalorder %s69, 0
      %s71 = scalar_select %p70, %s69, 0
      %s72 = ssub.s32 %s23, %s35
      %s73 = ssub.s32 %s67, %s71
      %s74 = sor.u32 %s72, %s73
      %p75 = scmp.eq.s32.totalorder %s74, 0
      %s77 = sadd.s32 %s76, 1
      %s78 = scalar_select %p75, %s76, %s77
      %p81 = pneg %p75
      %p82 = scmp.eq.s32.totalorder %s16, 3
      %p83 = por %p81, %p82
      %p84 = scmp.ne.s32.totalorder %s76, %s79
      %p85 = scmp.eq.s32.totalorder %s16, 0
      %p86 = por %p84, %p85
      %p87 = scmp.ne.s32.totalorder %s76, %s79
      %p88 = scmp.eq.s32.totalorder %s21, 3
      %p89 = por %p87, %p88
      %p90 = scmp.ne.s32.totalorder %s79, %s80
      %p91 = scmp.eq.s32.totalorder %s21, 0
      %p92 = por %p90, %p91
      %p93 = scmp.ne.s32.totalorder %s79, %s80
      %p94 = scmp.eq.s32.totalorder %s22, 3
      %p95 = por %p93, %p94
      %p97 = scmp.ne.s32.totalorder %s80, %s96
      %p98 = scmp.eq.s32.totalorder %s22, 0
      %p99 = por %p97, %p98
      %s100 = smul.u32 %s24, 8
      %s101 = sadd.s32 %s100, 8
      %p102 = scmp.lt.s32.totalorder %s101, 15
      %s103 = scalar_select %p102, %s101, 15
      %s104 = smul.u32 %s31, 8
      %s105 = sadd.s32 %s104, 8
      %p106 = scmp.lt.s32.totalorder %s105, 15
      %s107 = scalar_select %p106, %s105, 15
      %s108 = ssub.s32 %s23, %s35
      %s109 = ssub.s32 %s103, %s107
      %s110 = sor.u32 %s108, %s109
      %p111 = scmp.eq.s32.totalorder %s110, 0
      %s113 = sadd.s32 %s112, 1
      %s114 = scalar_select %p111, %s112, %s113
      %p117 = pneg %p111
      %p118 = scmp.eq.s32.totalorder %s16, 3
      %p119 = por %p117, %p118
      %p120 = scmp.ne.s32.totalorder %s112, %s115
      %p121 = scmp.eq.s32.totalorder %s16, 0
      %p122 = por %p120, %p121
      %p123 = scmp.ne.s32.totalorder %s112, %s115
      %p124 = scmp.eq.s32.totalorder %s21, 3
      %p125 = por %p123, %p124
      %p126 = scmp.ne.s32.totalorder %s115, %s116
      %p127 = scmp.eq.s32.totalorder %s21, 0
      %p128 = por %p126, %p127
      %p129 = scmp.ne.s32.totalorder %s115, %s116
      %p130 = scmp.eq.s32.totalorder %s22, 3
      %p131 = por %p129, %p130
      %p133 = scmp.ne.s32.totalorder %s116, %s132
      %p134 = scmp.eq.s32.totalorder %s22, 0
      %p135 = por %p133, %p134
      %s136 = ssub.s32 %s23, %s35
      %p137 = scmp.eq.s32.totalorder %s136, 0
      %s139 = sadd.s32 %s138, 1
      %s140 = scalar_select %p137, %s138, %s139
      %p143 = pneg %p137
      %p144 = scmp.eq.s32.totalorder %s16, 3
      %p145 = por %p143, %p144
      %p146 = scmp.ne.s32.totalorder %s138, %s141
      %p147 = scmp.eq.s32.totalorder %s16, 0
      %p148 = por %p146, %p147
      %p149 = scmp.ne.s32.totalorder %s138, %s141
      %p150 = scmp.eq.s32.totalorder %s21, 3
      %p151 = por %p149, %p150
      %p152 = scmp.ne.s32.totalorder %s141, %s142
      %p153 = scmp.eq.s32.totalorder %s21, 0
      %p154 = por %p152, %p153
      %p155 = scmp.ne.s32.totalorder %s141, %s142
      %p156 = scmp.eq.s32.totalorder %s22, 3
      %p157 = por %p155, %p156
      %p159 = scmp.ne.s32.totalorder %s142, %s158
      %p160 = scmp.eq.s32.totalorder %s22, 0
      %p161 = por %p159, %p160
      %s163 = sadd.s32 %s162, 1
      %p166 = scmp.eq.s32.totalorder %s16, 3
      %p167 = scmp.ne.s32.totalorder %s162, %s164
      %p168 = scmp.eq.s32.totalorder %s16, 0
      %p169 = por %p167, %p168
      %p170 = scmp.ne.s32.totalorder %s162, %s164
      %p171 = scmp.eq.s32.totalorder %s21, 3
      %p172 = por %p170, %p171
      %p173 = scmp.ne.s32.totalorder %s164, %s165
      %p174 = scmp.eq.s32.totalorder %s21, 0
      %p175 = por %p173, %p174
      %p176 = scmp.ne.s32.totalorder %s164, %s165
      %p177 = scmp.eq.s32.totalorder %s22, 3
      %p178 = por %p176, %p177
      %p180 = scmp.ne.s32.totalorder %s165, %s179
      %p181 = scmp.eq.s32.totalorder %s22, 0
      %p182 = por %p180, %p181
      %s184 = sadd.s32 %s183, 1
      %p187 = scmp.eq.s32.totalorder %s16, 3
      %p188 = scmp.ne.s32.totalorder %s183, %s185
      %p189 = scmp.eq.s32.totalorder %s16, 0
      %p190 = por %p188, %p189
      %p191 = scmp.ne.s32.totalorder %s183, %s185
      %p192 = scmp.eq.s32.totalorder %s21, 3
      %p193 = por %p191, %p192
      %p194 = scmp.ne.s32.totalorder %s185, %s186
      %p195 = scmp.eq.s32.totalorder %s21, 0
      %p196 = por %p194, %p195
      %p197 = scmp.ne.s32.totalorder %s185, %s186
      %p198 = scmp.eq.s32.totalorder %s22, 3
      %p199 = por %p197, %p198
      %p201 = scmp.ne.s32.totalorder %s186, %s200
      %p202 = scmp.eq.s32.totalorder %s22, 0
      %p203 = por %p201, %p202
      %s205 = sadd.s32 %s204, 1
      %p208 = scmp.eq.s32.totalorder %s16, 3
      %p209 = scmp.ne.s32.totalorder %s204, %s206
      %p210 = scmp.eq.s32.totalorder %s16, 0
      %p211 = por %p209, %p210
      %p212 = scmp.ne.s32.totalorder %s204, %s206
      %p213 = scmp.eq.s32.totalorder %s21, 3
      %p214 = por %p212, %p213
      %p215 = scmp.ne.s32.totalorder %s206, %s207
      %p216 = scmp.eq.s32.totalorder %s21, 0
      %p217 = por %p215, %p216
      %p218 = scmp.ne.s32.totalorder %s206, %s207
      %p219 = scmp.eq.s32.totalorder %s22, 3
      %p220 = por %p218, %p219
      %p222 = scmp.ne.s32.totalorder %s207, %s221
      %p223 = scmp.eq.s32.totalorder %s22, 0
      %p224 = por %p222, %p223
      %s225 = ssub.s32 %s23, %s35
      %s226 = ssub.s32 %s24, %s31
      %s227 = sor.u32 %s225, %s226
      %p228 = scmp.eq.s32.totalorder %s227, 0
      %s230 = sadd.s32 %s229, 1
      %s231 = scalar_select %p228, %s229, %s230
      %p234 = pneg %p228
      %p235 = scmp.eq.s32.totalorder %s16, 3
      %p236 = por %p234, %p235
      %p237 = scmp.ne.s32.totalorder %s229, %s232
      %p238 = scmp.eq.s32.totalorder %s16, 0
      %p239 = por %p237, %p238
      %p240 = scmp.ne.s32.totalorder %s229, %s232
      %p241 = scmp.eq.s32.totalorder %s21, 3
      %p242 = por %p240, %p241
      %p243 = scmp.ne.s32.totalorder %s232, %s233
      %p244 = scmp.eq.s32.totalorder %s21, 0
      %p245 = por %p243, %p244
      %p246 = scmp.ne.s32.totalorder %s232, %s233
      %p247 = scmp.eq.s32.totalorder %s22, 3
      %p248 = por %p246, %p247
      %p250 = scmp.ne.s32.totalorder %s233, %s249
      %p251 = scmp.eq.s32.totalorder %s22, 0
      %p252 = por %p250, %p251
      %p253 = scmp.le.s32.totalorder 1, %s16
      %p254 = scmp.lt.s32.totalorder %s16, 5
      %p255 = pnand %p253, %p254
      %p256 = pneg %p255
      // Predicated region
      $region9: #{tpu_custom_call.1} parent=5 // pred_check
        _
      $region10: #{tpu_custom_call.1} parent=5 // pred_check_branch
        %258 = sbr.rel (%p255) target = $region12
      $region11: #{tpu_custom_call.1} parent=5 // pred_region
        %s259 = ssub.s32 %s16, 1
        // Predicated region
        $region13: #{tpu_custom_call.1} parent=11 // pred_check
          %p260 = pneg %p175
        $region14: #{tpu_custom_call.1} parent=11 // pred_check_branch
          %262 = sbr.rel (%p260) target = $region16
        $region15: #{tpu_custom_call.1} parent=11 // pred_region
          _
        $region16: #{tpu_custom_call.1} parent=11 // pred_fallthru
          _
        // Predicated region
        $region17: #{tpu_custom_call.1} parent=11 // pred_check
          %p263 = pneg %p196
        $region18: #{tpu_custom_call.1} parent=11 // pred_check_branch
          %265 = sbr.rel (%p263) target = $region20
        $region19: #{tpu_custom_call.1} parent=11 // pred_region
          _
        $region20: #{tpu_custom_call.1} parent=11 // pred_fallthru
          _
        // Predicated region
        $region21: #{tpu_custom_call.1} parent=11 // pred_check
          %p266 = pneg %p217
        $region22: #{tpu_custom_call.1} parent=11 // pred_check_branch
          %268 = sbr.rel (%p266) target = $region24
        $region23: #{tpu_custom_call.1} parent=11 // pred_region
          _
        $region24: #{tpu_custom_call.1} parent=11 // pred_fallthru
          _
      $region12: #{tpu_custom_call.1} parent=5 // pred_fallthru
        _
      %p269 = scmp.lt.s32.totalorder %s16, 4
      // Predicated region
      $region25: #{tpu_custom_call.1} parent=5 // pred_check
        %p270 = pneg %p269
      $region26: #{tpu_custom_call.1} parent=5 // pred_check_branch
        %272 = sbr.rel (%p270) target = $region28
      $region27: #{tpu_custom_call.1} parent=5 // pred_region
        // Predicated region
        $region29: #{tpu_custom_call.1} parent=27 // pred_check
          %p273 = pneg %p50
        $region30: #{tpu_custom_call.1} parent=27 // pred_check_branch
          %275 = sbr.rel (%p273) target = $region32
        $region31: #{tpu_custom_call.1} parent=27 // pred_region
          %s276 = smul.u32 8, %s24
          %p277 = scmp.lt.s32.totalorder %s23, 1
          %s278 = scalar_select %p277, %s23, 1
          %p279 = scmp.lt.s32.totalorder %s276, 15
          %s280 = scalar_select %p279, %s276, 15
          %s281 = smul.addr %s280, 2
          %s282 = smul.addr %s278, 32
          %s283 = sadd.s32 %s281, %s282
          %s284 = smul.addr %s283, 4
          %s285 = scalar_lea.vmem %s0, %s284
          %s286 = smul.u32 8, %s24
        $region32: #{tpu_custom_call.1} parent=27 // pred_fallthru
          _
        // Predicated region
        $region33: #{tpu_custom_call.1} parent=27 // pred_check
          %p287 = pneg %p86
        $region34: #{tpu_custom_call.1} parent=27 // pred_check_branch
          %289 = sbr.rel (%p287) target = $region36
        $region35: #{tpu_custom_call.1} parent=27 // pred_region
          %s290 = smul.u32 %s24, 8
          %s291 = ssub.s32 %s290, 1
          %p292 = scmp.gt.s32.totalorder %s291, 0
          %s293 = scalar_select %p292, %s291, 0
          %p294 = scmp.lt.s32.totalorder %s23, 1
          %s295 = scalar_select %p294, %s23, 1
          %p296 = scmp.lt.s32.totalorder %s293, 15
          %s297 = scalar_select %p296, %s293, 15
          %s298 = smul.addr %s297, 2
          %s299 = smul.addr %s295, 32
          %s300 = sadd.s32 %s298, %s299
          %s301 = smul.addr %s300, 4
          %s302 = scalar_lea.vmem %s1, %s301
          %s303 = smul.u32 %s24, 8
          %s304 = ssub.s32 %s303, 1
          %p305 = scmp.gt.s32.totalorder %s304, 0
          %s306 = scalar_select %p305, %s304, 0
        $region36: #{tpu_custom_call.1} parent=27 // pred_fallthru
          _
        // Predicated region
        $region37: #{tpu_custom_call.1} parent=27 // pred_check
          %p307 = pneg %p122
        $region38: #{tpu_custom_call.1} parent=27 // pred_check_branch
          %309 = sbr.rel (%p307) target = $region40
        $region39: #{tpu_custom_call.1} parent=27 // pred_region
          %s310 = smul.u32 %s24, 8
          %s311 = sadd.s32 %s310, 8
          %p312 = scmp.lt.s32.totalorder %s311, 15
          %s313 = scalar_select %p312, %s311, 15
          %p314 = scmp.lt.s32.totalorder %s23, 1
          %s315 = scalar_select %p314, %s23, 1
          %p316 = scmp.lt.s32.totalorder %s313, 15
          %s317 = scalar_select %p316, %s313, 15
          %s318 = smul.addr %s317, 2
          %s319 = smul.addr %s315, 32
          %s320 = sadd.s32 %s318, %s319
          %s321 = smul.addr %s320, 4
          %s322 = scalar_lea.vmem %s2, %s321
          %s323 = smul.u32 %s24, 8
          %s324 = sadd.s32 %s323, 8
          %p325 = scmp.lt.s32.totalorder %s324, 15
          %s326 = scalar_select %p325, %s324, 15
        $region40: #{tpu_custom_call.1} parent=27 // pred_fallthru
          _
        // Predicated region
        $region41: #{tpu_custom_call.1} parent=27 // pred_check
          %p327 = pneg %p148
        $region42: #{tpu_custom_call.1} parent=27 // pred_check_branch
          %329 = sbr.rel (%p327) target = $region44
        $region43: #{tpu_custom_call.1} parent=27 // pred_region
          %p330 = scmp.lt.s32.totalorder %s23, 1
          %s331 = scalar_select %p330, %s23, 1
          %s332 = smul.addr %s331, 9
          %s333 = smul.addr %s332, 4
          %s334 = scalar_lea.vmem %s3, %s333
        $region44: #{tpu_custom_call.1} parent=27 // pred_fallthru
          _
      $region28: #{tpu_custom_call.1} parent=5 // pred_fallthru
        _
      %p335 = scmp.le.s32.totalorder 1, %s16
      %p336 = scmp.lt.s32.totalorder %s16, 5
      %p337 = pnand %p335, %p336
      %p338 = pneg %p337
      // Predicated region
      $region45: #{tpu_custom_call.1} parent=5 // pred_check
        _
      $region46: #{tpu_custom_call.1} parent=5 // pred_check_branch
        %340 = sbr.rel (%p337) target = $region48
      $region47: #{tpu_custom_call.1} parent=5 // pred_region
        %s341 = ssub.s32 %s16, 1
        %s342 = smul.u32 8, %s26
        %p343 = scmp.lt.s32.totalorder %s25, 1
        %s344 = scalar_select %p343, %s25, 1
        %p345 = scmp.lt.s32.totalorder %s342, 15
        %s346 = scalar_select %p345, %s342, 15
        %s347 = smul.addr %s346, 2
        %s348 = smul.addr %s344, 32
        %s349 = sadd.s32 %s347, %s348
        %s350 = smul.addr %s349, 4
        %s351 = scalar_lea.vmem %s0, %s350
        %p352 = pneg %p56
        %p353 = pneg %p53
        %s354 = smul.u32 %s26, 8
        %s355 = ssub.s32 %s354, 1
        %p356 = scmp.gt.s32.totalorder %s355, 0
        %s357 = scalar_select %p356, %s355, 0
        %p358 = scmp.lt.s32.totalorder %s25, 1
        %s359 = scalar_select %p358, %s25, 1
        %p360 = scmp.lt.s32.totalorder %s357, 15
        %s361 = scalar_select %p360, %s357, 15
        %s362 = smul.addr %s361, 2
        %s363 = smul.addr %s359, 32
        %s364 = sadd.s32 %s362, %s363
        %s365 = smul.addr %s364, 4
        %s366 = scalar_lea.vmem %s1, %s365
        %p367 = pneg %p92
        %p368 = pneg %p89
        %s369 = smul.u32 %s26, 8
        %s370 = sadd.s32 %s369, 8
        %p371 = scmp.lt.s32.totalorder %s370, 15
        %s372 = scalar_select %p371, %s370, 15
        %p373 = scmp.lt.s32.totalorder %s25, 1
        %s374 = scalar_select %p373, %s25, 1
        %p375 = scmp.lt.s32.totalorder %s372, 15
        %s376 = scalar_select %p375, %s372, 15
        %s377 = smul.addr %s376, 2
        %s378 = smul.addr %s374, 32
        %s379 = sadd.s32 %s377, %s378
        %s380 = smul.addr %s379, 4
        %s381 = scalar_lea.vmem %s2, %s380
        %p382 = pneg %p128
        %p383 = pneg %p125
        %p384 = scmp.lt.s32.totalorder %s25, 1
        %s385 = scalar_select %p384, %s25, 1
        %s386 = smul.addr %s385, 9
        %s387 = smul.addr %s386, 4
        %s388 = scalar_lea.vmem %s3, %s387
        %p389 = pneg %p154
        %p390 = pneg %p151
        %p391 = pneg %p175
        %p392 = pneg %p172
        %p393 = pneg %p196
        %p394 = pneg %p193
        %p395 = pneg %p217
        %p396 = pneg %p214
        %p397 = pneg %p245
        %p398 = pneg %p242
        %s399 = sand.u32 %s232, 1
        %s400 = scalar_lea.sflag [#allocation3], %s399
        %s401 = sand.u32 %s232, 1
        %s402 = smul.addr %s401, 8
        %s403 = scalar_lea.vmem [#allocation2], %s402
        %s404 = smul.u32 8, %s26
        %p405 = scmp.lt.s32.totalorder %s25, 1
        %s406 = scalar_select %p405, %s25, 1
        %p407 = scmp.lt.s32.totalorder %s404, 15
        %s408 = scalar_select %p407, %s404, 15
        %s409 = smul.addr %s408, 2
        %s410 = smul.addr %s406, 32
        %s411 = sadd.s32 %s409, %s410
        %s412 = smul.addr %s411, 4
        %s413 = scalar_lea.vmem %s0, %s412
        %s414 = smul.u32 8, %s26
        %s415 = smul.u32 %s26, 8
        %s416 = ssub.s32 %s415, 1
        %p417 = scmp.gt.s32.totalorder %s416, 0
        %s418 = scalar_select %p417, %s416, 0
        %p419 = scmp.lt.s32.totalorder %s25, 1
        %s420 = scalar_select %p419, %s25, 1
        %p421 = scmp.lt.s32.totalorder %s418, 15
        %s422 = scalar_select %p421, %s418, 15
        %s423 = smul.addr %s422, 2
        %s424 = smul.addr %s420, 32
        %s425 = sadd.s32 %s423, %s424
        %s426 = smul.addr %s425, 4
        %s427 = scalar_lea.vmem %s1, %s426
        %s428 = smul.u32 %s26, 8
        %s429 = ssub.s32 %s428, 1
        %p430 = scmp.gt.s32.totalorder %s429, 0
        %s431 = scalar_select %p430, %s429, 0
        %s432 = smul.u32 %s26, 8
        %s433 = sadd.s32 %s432, 8
        %p434 = scmp.lt.s32.totalorder %s433, 15
        %s435 = scalar_select %p434, %s433, 15
        %p436 = scmp.lt.s32.totalorder %s25, 1
        %s437 = scalar_select %p436, %s25, 1
        %p438 = scmp.lt.s32.totalorder %s435, 15
        %s439 = scalar_select %p438, %s435, 15
        %s440 = smul.addr %s439, 2
        %s441 = smul.addr %s437, 32
        %s442 = sadd.s32 %s440, %s441
        %s443 = smul.addr %s442, 4
        %s444 = scalar_lea.vmem %s2, %s443
        %s445 = smul.u32 %s26, 8
        %s446 = sadd.s32 %s445, 8
        %p447 = scmp.lt.s32.totalorder %s446, 15
        %s448 = scalar_select %p447, %s446, 15
        %p449 = scmp.lt.s32.totalorder %s25, 1
        %s450 = scalar_select %p449, %s25, 1
        %s451 = smul.addr %s450, 9
        %s452 = smul.addr %s451, 4
        %s453 = scalar_lea.vmem %s3, %s452
        %v455 = vld [vmem:[%s413] sm:$0xf]
        %v456 = vld [vmem:[%s413 + $0x4] sm:$0xf]
        %v457 = vld [vmem:[%s413 + $0x8] sm:$0xf]
        %v458 = vld [vmem:[%s413 + $0xc] sm:$0xf]
        %v459 = vld [vmem:[%s413 + $0x10] sm:$0xf]
        %v460 = vld [vmem:[%s413 + $0x14] sm:$0xf]
        %v461 = vld [vmem:[%s413 + $0x18] sm:$0xf]
        %v462 = vld [vmem:[%s413 + $0x1c] sm:$0xf]
        %v463 = vld [vmem:[%s413 + $0x20] sm:$0xf]
        %v464 = vld [vmem:[%s413 + $0x24] sm:$0xf]
        %v465 = vld [vmem:[%s413 + $0x28] sm:$0xf]
        %v466 = vld [vmem:[%s413 + $0x2c] sm:$0xf]
        %v467 = vld [vmem:[%s413 + $0x30] sm:$0xf]
        %v468 = vld [vmem:[%s413 + $0x34] sm:$0xf]
        %v469 = vld [vmem:[%s413 + $0x38] sm:$0xf]
        %v470 = vld [vmem:[%s413 + $0x3c] sm:$0xf]
        %v471 = vld [vmem:[%s427] sm:$0xf]
        %v472 = vld [vmem:[%s427 + $0x4] sm:$0xf]
        %v473 = vld [vmem:[%s444] sm:$0xf]
        %v474 = vld [vmem:[%s444 + $0x4] sm:$0xf]
        %v485 = vunpack.c.l.b16 %v472
        %v486 = vunpack.c.l.b16 %v456
        %v487 = vunpack.c.l.b16 %v458
        %v488 = vunpack.c.l.b16 %v460
        %v489 = vunpack.c.l.b16 %v462
        %v490 = vunpack.c.l.b16 %v464
        %v491 = vunpack.c.l.b16 %v466
        %v492 = vunpack.c.l.b16 %v468
        %v493 = vunpack.c.l.b16 %v470
        %v494 = vunpack.c.l.b16 %v474
        %v495 = vpack.c.b16 %v485, %v485
        %v496 = vpack.c.b16 %v486, %v486
        %v497 = vpack.c.b16 %v487, %v487
        %v498 = vpack.c.b16 %v488, %v488
        %v499 = vpack.c.b16 %v489, %v489
        %v500 = vpack.c.b16 %v490, %v490
        %v501 = vpack.c.b16 %v491, %v491
        %v502 = vpack.c.b16 %v492, %v492
        %v503 = vpack.c.b16 %v493, %v493
        %v504 = vpack.c.b16 %v494, %v494
        %v506 = vshrl.u32 %v495, 16
        %v508 = vrot.slane %v506, 3
        %v510 = vshrl.u32 %v496, 16
        %v512 = vrot.slane %v510, 3
        %v514 = vshrl.u32 %v497, 16
        %v516 = vrot.slane %v514, 3
        %v518 = vshrl.u32 %v498, 16
        %v520 = vrot.slane %v518, 3
        %v522 = vshrl.u32 %v499, 16
        %v524 = vrot.slane %v522, 3
        %v526 = vshrl.u32 %v500, 16
        %v528 = vrot.slane %v526, 3
        %v530 = vshrl.u32 %v501, 16
        %v532 = vrot.slane %v530, 3
        %v534 = vshrl.u32 %v502, 16
        %v536 = vrot.slane %v534, 3
        %v538 = vshrl.u32 %v503, 16
        %v540 = vrot.slane %v538, 3
        %v542 = vshrl.u32 %v504, 16
        %v544 = vrot.slane %v542, 3
        %v565 = vunpack.c.l.b16 %v471
        %v566 = vunpack.c.l.b16 %v455
        %v567 = vunpack.c.l.b16 %v457
        %v568 = vunpack.c.l.b16 %v459
        %v569 = vunpack.c.l.b16 %v461
        %v570 = vunpack.c.l.b16 %v463
        %v571 = vunpack.c.l.b16 %v465
        %v572 = vunpack.c.l.b16 %v467
        %v573 = vunpack.c.l.b16 %v469
        %v574 = vunpack.c.l.b16 %v473
        %v575 = vpack.c.b16 %v485, %v565
        %v576 = vpack.c.b16 %v486, %v566
        %v577 = vpack.c.b16 %v487, %v567
        %v578 = vpack.c.b16 %v488, %v568
        %v579 = vpack.c.b16 %v489, %v569
        %v580 = vpack.c.b16 %v490, %v570
        %v581 = vpack.c.b16 %v491, %v571
        %v582 = vpack.c.b16 %v492, %v572
        %v583 = vpack.c.b16 %v493, %v573
        %v584 = vpack.c.b16 %v494, %v574
        %v586 = vshrl.u32 %v575, 16
        %v588 = vrot.slane %v586, 7
        %v589 = vshll.u32 %v575, 16
        %v591 = vor.u32 %v588, %v589
        %v593 = vshrl.u32 %v576, 16
        %v595 = vrot.slane %v593, 7
        %v596 = vshll.u32 %v576, 16
        %v598 = vor.u32 %v595, %v596
        %v600 = vshrl.u32 %v577, 16
        %v602 = vrot.slane %v600, 7
        %v603 = vshll.u32 %v577, 16
        %v605 = vor.u32 %v602, %v603
        %v607 = vshrl.u32 %v578, 16
        %v609 = vrot.slane %v607, 7
        %v610 = vshll.u32 %v578, 16
        %v612 = vor.u32 %v609, %v610
        %v614 = vshrl.u32 %v579, 16
        %v616 = vrot.slane %v614, 7
        %v617 = vshll.u32 %v579, 16
        %v619 = vor.u32 %v616, %v617
        %v621 = vshrl.u32 %v580, 16
        %v623 = vrot.slane %v621, 7
        %v624 = vshll.u32 %v580, 16
        %v626 = vor.u32 %v623, %v624
        %v628 = vshrl.u32 %v581, 16
        %v630 = vrot.slane %v628, 7
        %v631 = vshll.u32 %v581, 16
        %v633 = vor.u32 %v630, %v631
        %v635 = vshrl.u32 %v582, 16
        %v637 = vrot.slane %v635, 7
        %v638 = vshll.u32 %v582, 16
        %v640 = vor.u32 %v637, %v638
        %v642 = vshrl.u32 %v583, 16
        %v644 = vrot.slane %v642, 7
        %v645 = vshll.u32 %v583, 16
        %v647 = vor.u32 %v644, %v645
        %v649 = vshrl.u32 %v584, 16
        %v651 = vrot.slane %v649, 7
        %v652 = vshll.u32 %v584, 16
        %v654 = vor.u32 %v651, %v652
        %vm665 = vcmask 1040384
        %vm666 = vsmask.f32 256
        %vm667 = vmand %vm665, %vm666
        %v668 = vsel %vm667, %v508, %v591
        %v669 = vsel %vm667, %v512, %v598
        %v670 = vsel %vm667, %v516, %v605
        %v671 = vsel %vm667, %v520, %v612
        %v672 = vsel %vm667, %v524, %v619
        %v673 = vsel %vm667, %v528, %v626
        %v674 = vsel %vm667, %v532, %v633
        %v675 = vsel %vm667, %v536, %v640
        %v676 = vsel %vm667, %v540, %v647
        %v677 = vsel %vm667, %v544, %v654
        %v678 = vrot.slane %v589, 1
        %v679 = vor.u32 %v586, %v678
        %v680 = vrot.slane %v596, 1
        %v681 = vor.u32 %v593, %v680
        %v682 = vrot.slane %v603, 1
        %v683 = vor.u32 %v600, %v682
        %v684 = vrot.slane %v610, 1
        %v685 = vor.u32 %v607, %v684
        %v686 = vrot.slane %v617, 1
        %v687 = vor.u32 %v614, %v686
        %v688 = vrot.slane %v624, 1
        %v689 = vor.u32 %v621, %v688
        %v690 = vrot.slane %v631, 1
        %v691 = vor.u32 %v628, %v690
        %v692 = vrot.slane %v638, 1
        %v693 = vor.u32 %v635, %v692
        %v694 = vrot.slane %v645, 1
        %v695 = vor.u32 %v642, %v694
        %v696 = vrot.slane %v652, 1
        %v697 = vor.u32 %v649, %v696
        %v708 = vpack.c.b16 %v565, %v565
        %v709 = vpack.c.b16 %v566, %v566
        %v710 = vpack.c.b16 %v567, %v567
        %v711 = vpack.c.b16 %v568, %v568
        %v712 = vpack.c.b16 %v569, %v569
        %v713 = vpack.c.b16 %v570, %v570
        %v714 = vpack.c.b16 %v571, %v571
        %v715 = vpack.c.b16 %v572, %v572
        %v716 = vpack.c.b16 %v573, %v573
        %v717 = vpack.c.b16 %v574, %v574
        %v719 = vshll.u32 %v708, 16
        %v721 = vrot.slane %v719, 1
        %v723 = vshll.u32 %v709, 16
        %v725 = vrot.slane %v723, 1
        %v727 = vshll.u32 %v710, 16
        %v729 = vrot.slane %v727, 1
        %v731 = vshll.u32 %v711, 16
        %v733 = vrot.slane %v731, 1
        %v735 = vshll.u32 %v712, 16
        %v737 = vrot.slane %v735, 1
        %v739 = vshll.u32 %v713, 16
        %v741 = vrot.slane %v739, 1
        %v743 = vshll.u32 %v714, 16
        %v745 = vrot.slane %v743, 1
        %v747 = vshll.u32 %v715, 16
        %v749 = vrot.slane %v747, 1
        %v751 = vshll.u32 %v716, 16
        %v753 = vrot.slane %v751, 1
        %v755 = vshll.u32 %v717, 16
        %v757 = vrot.slane %v755, 1
        %vm768 = vcmask 1047552
        %vm769 = vsmask.f32 7424
        %vm770 = vmand %vm768, %vm769
        %v771 = vsel %vm770, %v679, %v721
        %v772 = vsel %vm770, %v681, %v725
        %v773 = vsel %vm770, %v683, %v729
        %v774 = vsel %vm770, %v685, %v733
        %v775 = vsel %vm770, %v687, %v737
        %v776 = vsel %vm770, %v689, %v741
        %v777 = vsel %vm770, %v691, %v745
        %v778 = vsel %vm770, %v693, %v749
        %v779 = vsel %vm770, %v695, %v753
        %v780 = vsel %vm770, %v697, %v757
        %v781 = vld [vmem:[%s453] sm:$0xf]
        %s782 = scalar_lea.vmem %s453, 4
        %v783 = vld [vmem:[%s782] sm:$0xf]
        %vm784 = vcmask 64512
        %v786 = vsel %vm784, %v783, 0
        %v788 = vsel %vm784, %v575, 0
        %v790 = vsel %vm784, %v576, 0
        %v792 = vsel %vm784, %v577, 0
        %v794 = vsel %vm784, %v578, 0
        %v796 = vsel %vm784, %v579, 0
        %v798 = vsel %vm784, %v580, 0
        %v800 = vsel %vm784, %v581, 0
        %v802 = vsel %vm784, %v582, 0
        %804 = vmatprep.subr.bf16.mxu0 0
        %805 = vmatpush1.bf16.xpose.msra.mxu0 %v802
        %806 = vmatprep.subr.bf16.mxu0 0
        %807 = vmatpush1.bf16.xpose.msra.mxu0 %v800
        %808 = vmatprep.subr.bf16.mxu0 0
        %809 = vmatpush1.bf16.xpose.msra.mxu0 %v798
        %810 = vmatprep.subr.bf16.mxu0 0
        %811 = vmatpush1.bf16.xpose.msra.mxu0 %v796
        %812 = vmatprep.subr.bf16.mxu0 0
        %813 = vmatpush1.bf16.xpose.msra.mxu0 %v794
        %814 = vmatprep.subr.bf16.mxu0 0
        %815 = vmatpush1.bf16.xpose.msra.mxu0 %v792
        %816 = vmatprep.subr.bf16.mxu0 0
        %817 = vmatpush1.bf16.xpose.msra.mxu0 %v790
        %818 = vmatprep.subr.bf16.mxu0 0
        %819 = vmatpush1.bf16.xpose.msra.mxu0 %v788
        %820 = vmatprep.subr.bf16.mxu0 0
        %821 = vmatpush2.bf16.xpose.msra.mxu0 0
        %822 = vmatprep.subr.bf16.mxu0 0
        %823 = vmatpush2.bf16.xpose.msra.mxu0 0
        %824 = vmatprep.subr.bf16.mxu0 0
        %825 = vmatpush2.bf16.xpose.msra.mxu0 0
        %826 = vmatprep.subr.bf16.mxu0 0
        %827 = vmatpush2.bf16.xpose.msra.mxu0 0
        %828 = vmatprep.subr.bf16.mxu0 0
        %829 = vmatpush2.bf16.xpose.msra.mxu0 0
        %830 = vmatprep.subr.bf16.mxu0 0
        %831 = vmatpush2.bf16.xpose.msra.mxu0 0
        %832 = vmatprep.subr.bf16.mxu0 0
        %833 = vmatpush2.bf16.xpose.msra.mxu0 0
        %834 = vmatprep.subr.bf16.mxu0 0
        %835 = vmatpush2.bf16.xpose.msra.mxu0 0
        %836 = vmatprep.mubr.bf16.mxu0 0
        %837 = vmatmul.mubr.bf16.gmra.mxu0 %v786
        %v838 = vpop.f32.mrf.mxu0
        %v839 = vadd.f32 0.0, %v838
        %v840 = vpop.f32.mrf.mxu0
        %v841 = vpop.f32.mrf.mxu0
        %v842 = vpop.f32.mrf.mxu0
        %843 = vdwg.mxu0
        %v845 = vsel %vm784, %v781, 0
        %v848 = vsel %vm784, %v668, 0
        %v851 = vsel %vm784, %v669, 0
        %v854 = vsel %vm784, %v670, 0
        %v857 = vsel %vm784, %v671, 0
        %v860 = vsel %vm784, %v672, 0
        %v863 = vsel %vm784, %v673, 0
        %v866 = vsel %vm784, %v674, 0
        %v869 = vsel %vm784, %v675, 0
        %871 = vmatprep.subr.bf16.mxu0 0
        %872 = vmatpush1.bf16.xpose.msra.mxu0 %v869
        %873 = vmatprep.subr.bf16.mxu0 0
        %874 = vmatpush1.bf16.xpose.msra.mxu0 %v866
        %875 = vmatprep.subr.bf16.mxu0 0
        %876 = vmatpush1.bf16.xpose.msra.mxu0 %v863
        %877 = vmatprep.subr.bf16.mxu0 0
        %878 = vmatpush1.bf16.xpose.msra.mxu0 %v860
        %879 = vmatprep.subr.bf16.mxu0 0
        %880 = vmatpush1.bf16.xpose.msra.mxu0 %v857
        %881 = vmatprep.subr.bf16.mxu0 0
        %882 = vmatpush1.bf16.xpose.msra.mxu0 %v854
        %883 = vmatprep.subr.bf16.mxu0 0
        %884 = vmatpush1.bf16.xpose.msra.mxu0 %v851
        %885 = vmatprep.subr.bf16.mxu0 0
        %886 = vmatpush1.bf16.xpose.msra.mxu0 %v848
        %887 = vmatprep.subr.bf16.mxu0 0
        %888 = vmatpush2.bf16.xpose.msra.mxu0 0
        %889 = vmatprep.subr.bf16.mxu0 0
        %890 = vmatpush2.bf16.xpose.msra.mxu0 0
        %891 = vmatprep.subr.bf16.mxu0 0
        %892 = vmatpush2.bf16.xpose.msra.mxu0 0
        %893 = vmatprep.subr.bf16.mxu0 0
        %894 = vmatpush2.bf16.xpose.msra.mxu0 0
        %895 = vmatprep.subr.bf16.mxu0 0
        %896 = vmatpush2.bf16.xpose.msra.mxu0 0
        %897 = vmatprep.subr.bf16.mxu0 0
        %898 = vmatpush2.bf16.xpose.msra.mxu0 0
        %899 = vmatprep.subr.bf16.mxu0 0
        %900 = vmatpush2.bf16.xpose.msra.mxu0 0
        %901 = vmatprep.subr.bf16.mxu0 0
        %902 = vmatpush2.bf16.xpose.msra.mxu0 0
        %903 = vmatprep.mubr.bf16.mxu0 0
        %904 = vmatmul.mubr.bf16.gmra.mxu0 %v845
        %v905 = vpop.f32.mrf.mxu0
        %v906 = vadd.f32 %v839, %v905
        %v907 = vpop.f32.mrf.mxu0
        %v908 = vpop.f32.mrf.mxu0
        %v909 = vpop.f32.mrf.mxu0
        %910 = vdwg.mxu0
        %s911 = scalar_lea.vmem %s453, 8
        %v912 = vld [vmem:[%s911] sm:$0xf]
        %v914 = vsel %vm784, %v912, 0
        %v917 = vsel %vm784, %v771, 0
        %v920 = vsel %vm784, %v772, 0
        %v923 = vsel %vm784, %v773, 0
        %v926 = vsel %vm784, %v774, 0
        %v929 = vsel %vm784, %v775, 0
        %v932 = vsel %vm784, %v776, 0
        %v935 = vsel %vm784, %v777, 0
        %v938 = vsel %vm784, %v778, 0
        %940 = vmatprep.subr.bf16.mxu0 0
        %941 = vmatpush1.bf16.xpose.msra.mxu0 %v938
        %942 = vmatprep.subr.bf16.mxu0 0
        %943 = vmatpush1.bf16.xpose.msra.mxu0 %v935
        %944 = vmatprep.subr.bf16.mxu0 0
        %945 = vmatpush1.bf16.xpose.msra.mxu0 %v932
        %946 = vmatprep.subr.bf16.mxu0 0
        %947 = vmatpush1.bf16.xpose.msra.mxu0 %v929
        %948 = vmatprep.subr.bf16.mxu0 0
        %949 = vmatpush1.bf16.xpose.msra.mxu0 %v926
        %950 = vmatprep.subr.bf16.mxu0 0
        %951 = vmatpush1.bf16.xpose.msra.mxu0 %v923
        %952 = vmatprep.subr.bf16.mxu0 0
        %953 = vmatpush1.bf16.xpose.msra.mxu0 %v920
        %954 = vmatprep.subr.bf16.mxu0 0
        %955 = vmatpush1.bf16.xpose.msra.mxu0 %v917
        %956 = vmatprep.subr.bf16.mxu0 0
        %957 = vmatpush2.bf16.xpose.msra.mxu0 0
        %958 = vmatprep.subr.bf16.mxu0 0
        %959 = vmatpush2.bf16.xpose.msra.mxu0 0
        %960 = vmatprep.subr.bf16.mxu0 0
        %961 = vmatpush2.bf16.xpose.msra.mxu0 0
        %962 = vmatprep.subr.bf16.mxu0 0
        %963 = vmatpush2.bf16.xpose.msra.mxu0 0
        %964 = vmatprep.subr.bf16.mxu0 0
        %965 = vmatpush2.bf16.xpose.msra.mxu0 0
        %966 = vmatprep.subr.bf16.mxu0 0
        %967 = vmatpush2.bf16.xpose.msra.mxu0 0
        %968 = vmatprep.subr.bf16.mxu0 0
        %969 = vmatpush2.bf16.xpose.msra.mxu0 0
        %970 = vmatprep.subr.bf16.mxu0 0
        %971 = vmatpush2.bf16.xpose.msra.mxu0 0
        %972 = vmatprep.mubr.bf16.mxu0 0
        %973 = vmatmul.mubr.bf16.gmra.mxu0 %v914
        %v974 = vpop.f32.mrf.mxu0
        %v975 = vadd.f32 0.0, %v974
        %v976 = vpop.f32.mrf.mxu0
        %v977 = vpop.f32.mrf.mxu0
        %v978 = vpop.f32.mrf.mxu0
        %979 = vdwg.mxu0
        %v980 = vadd.f32 %v906, %v975
        %s981 = scalar_lea.vmem %s453, 12
        %v982 = vld [vmem:[%s981] sm:$0xf]
        %v984 = vsel %vm784, %v982, 0
        %v987 = vsel %vm784, %v676, 0
        %989 = vmatprep.subr.bf16.mxu0 0
        %990 = vmatpush1.bf16.xpose.msra.mxu0 %v987
        %991 = vmatprep.subr.bf16.mxu0 0
        %992 = vmatpush1.bf16.xpose.msra.mxu0 %v869
        %993 = vmatprep.subr.bf16.mxu0 0
        %994 = vmatpush1.bf16.xpose.msra.mxu0 %v866
        %995 = vmatprep.subr.bf16.mxu0 0
        %996 = vmatpush1.bf16.xpose.msra.mxu0 %v863
        %997 = vmatprep.subr.bf16.mxu0 0
        %998 = vmatpush1.bf16.xpose.msra.mxu0 %v860
        %999 = vmatprep.subr.bf16.mxu0 0
        %1000 = vmatpush1.bf16.xpose.msra.mxu0 %v857
        %1001 = vmatprep.subr.bf16.mxu0 0
        %1002 = vmatpush1.bf16.xpose.msra.mxu0 %v854
        %1003 = vmatprep.subr.bf16.mxu0 0
        %1004 = vmatpush1.bf16.xpose.msra.mxu0 %v851
        %1005 = vmatprep.subr.bf16.mxu0 0
        %1006 = vmatpush2.bf16.xpose.msra.mxu0 0
        %1007 = vmatprep.subr.bf16.mxu0 0
        %1008 = vmatpush2.bf16.xpose.msra.mxu0 0
        %1009 = vmatprep.subr.bf16.mxu0 0
        %1010 = vmatpush2.bf16.xpose.msra.mxu0 0
        %1011 = vmatprep.subr.bf16.mxu0 0
        %1012 = vmatpush2.bf16.xpose.msra.mxu0 0
        %1013 = vmatprep.subr.bf16.mxu0 0
        %1014 = vmatpush2.bf16.xpose.msra.mxu0 0
        %1015 = vmatprep.subr.bf16.mxu0 0
        %1016 = vmatpush2.bf16.xpose.msra.mxu0 0
        %1017 = vmatprep.subr.bf16.mxu0 0
        %1018 = vmatpush2.bf16.xpose.msra.mxu0 0
        %1019 = vmatprep.subr.bf16.mxu0 0
        %1020 = vmatpush2.bf16.xpose.msra.mxu0 0
        %1021 = vmatprep.mubr.bf16.mxu0 0
        %1022 = vmatmul.mubr.bf16.gmra.mxu0 %v984
        %v1023 = vpop.f32.mrf.mxu0
        %v1024 = vadd.f32 0.0, %v1023
        %v1025 = vpop.f32.mrf.mxu0
        %v1026 = vpop.f32.mrf.mxu0
        %v1027 = vpop.f32.mrf.mxu0
        %1028 = vdwg.mxu0
        %v1029 = vadd.f32 %v980, %v1024
        %s1030 = scalar_lea.vmem %s453, 16
        %v1031 = vld [vmem:[%s1030] sm:$0xf]
        %v1033 = vsel %vm784, %v1031, 0
        %v1035 = vsel %vm784, %v583, 0
        %1037 = vmatprep.subr.bf16.mxu0 0
        %1038 = vmatpush1.bf16.xpose.msra.mxu0 %v1035
        %1039 = vmatprep.subr.bf16.mxu0 0
        %1040 = vmatpush1.bf16.xpose.msra.mxu0 %v802
        %1041 = vmatprep.subr.bf16.mxu0 0
        %1042 = vmatpush1.bf16.xpose.msra.mxu0 %v800
        %1043 = vmatprep.subr.bf16.mxu0 0
        %1044 = vmatpush1.bf16.xpose.msra.mxu0 %v798
        %1045 = vmatprep.subr.bf16.mxu0 0
        %1046 = vmatpush1.bf16.xpose.msra.mxu0 %v796
        %1047 = vmatprep.subr.bf16.mxu0 0
        %1048 = vmatpush1.bf16.xpose.msra.mxu0 %v794
        %1049 = vmatprep.subr.bf16.mxu0 0
        %1050 = vmatpush1.bf16.xpose.msra.mxu0 %v792
        %1051 = vmatprep.subr.bf16.mxu0 0
        %1052 = vmatpush1.bf16.xpose.msra.mxu0 %v790
        %1053 = vmatprep.subr.bf16.mxu0 0
        %1054 = vmatpush2.bf16.xpose.msra.mxu0 0
        %1055 = vmatprep.subr.bf16.mxu0 0
        %1056 = vmatpush2.bf16.xpose.msra.mxu0 0
        %1057 = vmatprep.subr.bf16.mxu0 0
        %1058 = vmatpush2.bf16.xpose.msra.mxu0 0
        %1059 = vmatprep.subr.bf16.mxu0 0
        %1060 = vmatpush2.bf16.xpose.msra.mxu0 0
        %1061 = vmatprep.subr.bf16.mxu0 0
        %1062 = vmatpush2.bf16.xpose.msra.mxu0 0
        %1063 = vmatprep.subr.bf16.mxu0 0
        %1064 = vmatpush2.bf16.xpose.msra.mxu0 0
        %1065 = vmatprep.subr.bf16.mxu0 0
        %1066 = vmatpush2.bf16.xpose.msra.mxu0 0
        %1067 = vmatprep.subr.bf16.mxu0 0
        %1068 = vmatpush2.bf16.xpose.msra.mxu0 0
        %1069 = vmatprep.mubr.bf16.mxu0 0
        %1070 = vmatmul.mubr.bf16.gmra.mxu0 %v1033
        %v1071 = vpop.f32.mrf.mxu0
        %v1072 = vadd.f32 0.0, %v1071
        %v1073 = vpop.f32.mrf.mxu0
        %v1074 = vpop.f32.mrf.mxu0
        %v1075 = vpop.f32.mrf.mxu0
        %1076 = vdwg.mxu0
        %v1077 = vadd.f32 %v1029, %v1072
        %s1078 = scalar_lea.vmem %s453, 20
        %v1079 = vld [vmem:[%s1078] sm:$0xf]
        %v1081 = vsel %vm784, %v1079, 0
        %v1084 = vsel %vm784, %v779, 0
        %1086 = vmatprep.subr.bf16.mxu0 0
        %1087 = vmatpush1.bf16.xpose.msra.mxu0 %v1084
        %1088 = vmatprep.subr.bf16.mxu0 0
        %1089 = vmatpush1.bf16.xpose.msra.mxu0 %v938
        %1090 = vmatprep.subr.bf16.mxu0 0
        %1091 = vmatpush1.bf16.xpose.msra.mxu0 %v935
        %1092 = vmatprep.subr.bf16.mxu0 0
        %1093 = vmatpush1.bf16.xpose.msra.mxu0 %v932
        %1094 = vmatprep.subr.bf16.mxu0 0
        %1095 = vmatpush1.bf16.xpose.msra.mxu0 %v929
        %1096 = vmatprep.subr.bf16.mxu0 0
        %1097 = vmatpush1.bf16.xpose.msra.mxu0 %v926
        %1098 = vmatprep.subr.bf16.mxu0 0
        %1099 = vmatpush1.bf16.xpose.msra.mxu0 %v923
        %1100 = vmatprep.subr.bf16.mxu0 0
        %1101 = vmatpush1.bf16.xpose.msra.mxu0 %v920
        %1102 = vmatprep.subr.bf16.mxu0 0
        %1103 = vmatpush2.bf16.xpose.msra.mxu0 0
        %1104 = vmatprep.subr.bf16.mxu0 0
        %1105 = vmatpush2.bf16.xpose.msra.mxu0 0
        %1106 = vmatprep.subr.bf16.mxu0 0
        %1107 = vmatpush2.bf16.xpose.msra.mxu0 0
        %1108 = vmatprep.subr.bf16.mxu0 0
        %1109 = vmatpush2.bf16.xpose.msra.mxu0 0
        %1110 = vmatprep.subr.bf16.mxu0 0
        %1111 = vmatpush2.bf16.xpose.msra.mxu0 0
        %1112 = vmatprep.subr.bf16.mxu0 0
        %1113 = vmatpush2.bf16.xpose.msra.mxu0 0
        %1114 = vmatprep.subr.bf16.mxu0 0
        %1115 = vmatpush2.bf16.xpose.msra.mxu0 0
        %1116 = vmatprep.subr.bf16.mxu0 0
        %1117 = vmatpush2.bf16.xpose.msra.mxu0 0
        %1118 = vmatprep.mubr.bf16.mxu0 0
        %1119 = vmatmul.mubr.bf16.gmra.mxu0 %v1081
        %v1120 = vpop.f32.mrf.mxu0
        %v1121 = vadd.f32 0.0, %v1120
        %v1122 = vpop.f32.mrf.mxu0
        %v1123 = vpop.f32.mrf.mxu0
        %v1124 = vpop.f32.mrf.mxu0
        %1125 = vdwg.mxu0
        %v1126 = vadd.f32 %v1077, %v1121
        %s1127 = scalar_lea.vmem %s453, 24
        %v1128 = vld [vmem:[%s1127] sm:$0xf]
        %v1130 = vsel %vm784, %v1128, 0
        %v1133 = vsel %vm784, %v677, 0
        %1135 = vmatprep.subr.bf16.mxu0 0
        %1136 = vmatpush1.bf16.xpose.msra.mxu0 %v1133
        %1137 = vmatprep.subr.bf16.mxu0 0
        %1138 = vmatpush1.bf16.xpose.msra.mxu0 %v987
        %1139 = vmatprep.subr.bf16.mxu0 0
        %1140 = vmatpush1.bf16.xpose.msra.mxu0 %v869
        %1141 = vmatprep.subr.bf16.mxu0 0
        %1142 = vmatpush1.bf16.xpose.msra.mxu0 %v866
        %1143 = vmatprep.subr.bf16.mxu0 0
        %1144 = vmatpush1.bf16.xpose.msra.mxu0 %v863
        %1145 = vmatprep.subr.bf16.mxu0 0
        %1146 = vmatpush1.bf16.xpose.msra.mxu0 %v860
        %1147 = vmatprep.subr.bf16.mxu0 0
        %1148 = vmatpush1.bf16.xpose.msra.mxu0 %v857
        %1149 = vmatprep.subr.bf16.mxu0 0
        %1150 = vmatpush1.bf16.xpose.msra.mxu0 %v854
        %1151 = vmatprep.subr.bf16.mxu0 0
        %1152 = vmatpush2.bf16.xpose.msra.mxu0 0
        %1153 = vmatprep.subr.bf16.mxu0 0
        %1154 = vmatpush2.bf16.xpose.msra.mxu0 0
        %1155 = vmatprep.subr.bf16.mxu0 0
        %1156 = vmatpush2.bf16.xpose.msra.mxu0 0
        %1157 = vmatprep.subr.bf16.mxu0 0
        %1158 = vmatpush2.bf16.xpose.msra.mxu0 0
        %1159 = vmatprep.subr.bf16.mxu0 0
        %1160 = vmatpush2.bf16.xpose.msra.mxu0 0
        %1161 = vmatprep.subr.bf16.mxu0 0
        %1162 = vmatpush2.bf16.xpose.msra.mxu0 0
        %1163 = vmatprep.subr.bf16.mxu0 0
        %1164 = vmatpush2.bf16.xpose.msra.mxu0 0
        %1165 = vmatprep.subr.bf16.mxu0 0
        %1166 = vmatpush2.bf16.xpose.msra.mxu0 0
        %1167 = vmatprep.mubr.bf16.mxu0 0
        %1168 = vmatmul.mubr.bf16.gmra.mxu0 %v1130
        %v1169 = vpop.f32.mrf.mxu0
        %v1170 = vadd.f32 0.0, %v1169
        %v1171 = vpop.f32.mrf.mxu0
        %v1172 = vpop.f32.mrf.mxu0
        %v1173 = vpop.f32.mrf.mxu0
        %1174 = vdwg.mxu0
        %v1175 = vadd.f32 %v1126, %v1170
        %s1176 = scalar_lea.vmem %s453, 28
        %v1177 = vld [vmem:[%s1176] sm:$0xf]
        %v1179 = vsel %vm784, %v1177, 0
        %v1181 = vsel %vm784, %v584, 0
        %1183 = vmatprep.subr.bf16.mxu0 0
        %1184 = vmatpush1.bf16.xpose.msra.mxu0 %v1181
        %1185 = vmatprep.subr.bf16.mxu0 0
        %1186 = vmatpush1.bf16.xpose.msra.mxu0 %v1035
        %1187 = vmatprep.subr.bf16.mxu0 0
        %1188 = vmatpush1.bf16.xpose.msra.mxu0 %v802
        %1189 = vmatprep.subr.bf16.mxu0 0
        %1190 = vmatpush1.bf16.xpose.msra.mxu0 %v800
        %1191 = vmatprep.subr.bf16.mxu0 0
        %1192 = vmatpush1.bf16.xpose.msra.mxu0 %v798
        %1193 = vmatprep.subr.bf16.mxu0 0
        %1194 = vmatpush1.bf16.xpose.msra.mxu0 %v796
        %1195 = vmatprep.subr.bf16.mxu0 0
        %1196 = vmatpush1.bf16.xpose.msra.mxu0 %v794
        %1197 = vmatprep.subr.bf16.mxu0 0
        %1198 = vmatpush1.bf16.xpose.msra.mxu0 %v792
        %1199 = vmatprep.subr.bf16.mxu0 0
        %1200 = vmatpush2.bf16.xpose.msra.mxu0 0
        %1201 = vmatprep.subr.bf16.mxu0 0
        %1202 = vmatpush2.bf16.xpose.msra.mxu0 0
        %1203 = vmatprep.subr.bf16.mxu0 0
        %1204 = vmatpush2.bf16.xpose.msra.mxu0 0
        %1205 = vmatprep.subr.bf16.mxu0 0
        %1206 = vmatpush2.bf16.xpose.msra.mxu0 0
        %1207 = vmatprep.subr.bf16.mxu0 0
        %1208 = vmatpush2.bf16.xpose.msra.mxu0 0
        %1209 = vmatprep.subr.bf16.mxu0 0
        %1210 = vmatpush2.bf16.xpose.msra.mxu0 0
        %1211 = vmatprep.subr.bf16.mxu0 0
        %1212 = vmatpush2.bf16.xpose.msra.mxu0 0
        %1213 = vmatprep.subr.bf16.mxu0 0
        %1214 = vmatpush2.bf16.xpose.msra.mxu0 0
        %1215 = vmatprep.mubr.bf16.mxu0 0
        %1216 = vmatmul.mubr.bf16.gmra.mxu0 %v1179
        %v1217 = vpop.f32.mrf.mxu0
        %v1218 = vadd.f32 0.0, %v1217
        %v1219 = vpop.f32.mrf.mxu0
        %v1220 = vpop.f32.mrf.mxu0
        %v1221 = vpop.f32.mrf.mxu0
        %1222 = vdwg.mxu0
        %v1223 = vadd.f32 %v1175, %v1218
        %s1224 = scalar_lea.vmem %s453, 32
        %v1225 = vld [vmem:[%s1224] sm:$0xf]
        %v1227 = vsel %vm784, %v1225, 0
        %v1230 = vsel %vm784, %v780, 0
        %1232 = vmatprep.subr.bf16.mxu0 0
        %1233 = vmatpush1.bf16.xpose.msra.mxu0 %v1230
        %1234 = vmatprep.subr.bf16.mxu0 0
        %1235 = vmatpush1.bf16.xpose.msra.mxu0 %v1084
        %1236 = vmatprep.subr.bf16.mxu0 0
        %1237 = vmatpush1.bf16.xpose.msra.mxu0 %v938
        %1238 = vmatprep.subr.bf16.mxu0 0
        %1239 = vmatpush1.bf16.xpose.msra.mxu0 %v935
        %1240 = vmatprep.subr.bf16.mxu0 0
        %1241 = vmatpush1.bf16.xpose.msra.mxu0 %v932
        %1242 = vmatprep.subr.bf16.mxu0 0
        %1243 = vmatpush1.bf16.xpose.msra.mxu0 %v929
        %1244 = vmatprep.subr.bf16.mxu0 0
        %1245 = vmatpush1.bf16.xpose.msra.mxu0 %v926
        %1246 = vmatprep.subr.bf16.mxu0 0
        %1247 = vmatpush1.bf16.xpose.msra.mxu0 %v923
        %1248 = vmatprep.subr.bf16.mxu0 0
        %1249 = vmatpush2.bf16.xpose.msra.mxu0 0
        %1250 = vmatprep.subr.bf16.mxu0 0
        %1251 = vmatpush2.bf16.xpose.msra.mxu0 0
        %1252 = vmatprep.subr.bf16.mxu0 0
        %1253 = vmatpush2.bf16.xpose.msra.mxu0 0
        %1254 = vmatprep.subr.bf16.mxu0 0
        %1255 = vmatpush2.bf16.xpose.msra.mxu0 0
        %1256 = vmatprep.subr.bf16.mxu0 0
        %1257 = vmatpush2.bf16.xpose.msra.mxu0 0
        %1258 = vmatprep.subr.bf16.mxu0 0
        %1259 = vmatpush2.bf16.xpose.msra.mxu0 0
        %1260 = vmatprep.subr.bf16.mxu0 0
        %1261 = vmatpush2.bf16.xpose.msra.mxu0 0
        %1262 = vmatprep.subr.bf16.mxu0 0
        %1263 = vmatpush2.bf16.xpose.msra.mxu0 0
        %1264 = vmatprep.mubr.bf16.mxu0 0
        %1265 = vmatmul.mubr.bf16.gmra.mxu0 %v1227
        %v1266 = vpop.f32.mrf.mxu0
        %v1267 = vadd.f32 0.0, %v1266
        %v1268 = vpop.f32.mrf.mxu0
        %v1269 = vpop.f32.mrf.mxu0
        %v1270 = vpop.f32.mrf.mxu0
        %1271 = vdwg.mxu0
        %v1272 = vadd.f32 %v1223, %v1267
        %v1273 = vld [vmem:[%s5] sm:$0xf]
        %v1275 = vsel %vm784, %v1273, 0
        %1277 = vmatprep.subr.bf16.mxu0 0
        %1278 = vmatpush1.bf16.xpose.msra.mxu0 %v1035
        %1279 = vmatprep.subr.bf16.mxu0 0
        %1280 = vmatpush1.bf16.xpose.msra.mxu0 %v802
        %1281 = vmatprep.subr.bf16.mxu0 0
        %1282 = vmatpush1.bf16.xpose.msra.mxu0 %v800
        %1283 = vmatprep.subr.bf16.mxu0 0
        %1284 = vmatpush1.bf16.xpose.msra.mxu0 %v798
        %1285 = vmatprep.subr.bf16.mxu0 0
        %1286 = vmatpush1.bf16.xpose.msra.mxu0 %v796
        %1287 = vmatprep.subr.bf16.mxu0 0
        %1288 = vmatpush1.bf16.xpose.msra.mxu0 %v794
        %1289 = vmatprep.subr.bf16.mxu0 0
        %1290 = vmatpush1.bf16.xpose.msra.mxu0 %v792
        %1291 = vmatprep.subr.bf16.mxu0 0
        %1292 = vmatpush1.bf16.xpose.msra.mxu0 %v790
        %1293 = vmatprep.subr.bf16.mxu0 0
        %1294 = vmatpush2.bf16.xpose.msra.mxu0 0
        %1295 = vmatprep.subr.bf16.mxu0 0
        %1296 = vmatpush2.bf16.xpose.msra.mxu0 0
        %1297 = vmatprep.subr.bf16.mxu0 0
        %1298 = vmatpush2.bf16.xpose.msra.mxu0 0
        %1299 = vmatprep.subr.bf16.mxu0 0
        %1300 = vmatpush2.bf16.xpose.msra.mxu0 0
        %1301 = vmatprep.subr.bf16.mxu0 0
        %1302 = vmatpush2.bf16.xpose.msra.mxu0 0
        %1303 = vmatprep.subr.bf16.mxu0 0
        %1304 = vmatpush2.bf16.xpose.msra.mxu0 0
        %1305 = vmatprep.subr.bf16.mxu0 0
        %1306 = vmatpush2.bf16.xpose.msra.mxu0 0
        %1307 = vmatprep.subr.bf16.mxu0 0
        %1308 = vmatpush2.bf16.xpose.msra.mxu0 0
        %1309 = vmatprep.mubr.bf16.mxu0 0
        %1310 = vmatmul.mubr.bf16.gmra.mxu0 %v1275
        %v1311 = vpop.f32.mrf.mxu0
        %v1312 = vadd.f32 0.0, %v1311
        %v1313 = vpop.f32.mrf.mxu0
        %v1314 = vpop.f32.mrf.mxu0
        %v1315 = vpop.f32.mrf.mxu0
        %1316 = vdwg.mxu0
        %v1317 = vld [vmem:[%s4] sm:$0xff]
        %1319 = vset.pattern.permute.xlu0 0
        %1320 = vperm.xlu0 %1319, %v1317
        %v1321 = vpop.permute.xlu0 %1320
        %v1323 = vadd.f32 %v1272, %v1321
        %vm1324 = vcmp.ge.f32.partialorder %v1323, 0.0
        %v1325 = vmul.f32 %v1323, 0.2
        %v1326 = vsel %vm1324, %v1323, %v1325
        %v1327 = vmul.f32 %v1326, 1.4142135
        %v1328 = vadd.f32 %v1327, %v1312
        %v1329 = vld [vmem:[%s6] sm:$0xff]
        %1331 = vset.pattern.permute.xlu0 0
        %1332 = vperm.xlu0 %1331, %v1329
        %v1333 = vpop.permute.xlu0 %1332
        %v1335 = vadd.f32 %v1328, %v1333
        %1336 = vst [vmem:[%s403] sm:$0xff] %v1335
        %s1337 = sand.u32 %s232, 1
        %s1338 = scalar_lea.sflag [#allocation3], %s1337
        %s1339 = sand.u32 %s232, 1
        %s1340 = smul.addr %s1339, 8
        %s1341 = scalar_lea.vmem [#allocation2], %s1340
        // Predicated region
        $region49: #{tpu_custom_call.1} parent=47 // pred_check
          %p1342 = pneg %p242
        $region50: #{tpu_custom_call.1} parent=47 // pred_check_branch
          %1344 = sbr.rel (%p1342) target = $region52
        $region51: #{tpu_custom_call.1} parent=47 // pred_region
          %s1346 = ssub.s32 128, 128
          %1347 = vsyncadd %s1338, %s1346
          %s1348 = smul.addr %s25, 2
          %s1349 = sadd.s32 %s26, %s1348
          %s1350 = smul.addr %s1349, 128
          %s1351 = scalar_lea.hbm %s7, %s1350
          %s1353 = sshll.u32 %s1341, 4
          %s1354 = int_to_ptr.vmem [resolvable:$true] %s1353
          %1356 = dma.vmem_to_hbm [thread:$0]  %s1354, 128, %s1351, %s1338
        $region52: #{tpu_custom_call.1} parent=47 // pred_fallthru
          _
      $region48: #{tpu_custom_call.1} parent=5 // pred_fallthru
        _
      %p1357 = scmp.le.s32.totalorder 2, %s16
      // Predicated region
      $region53: #{tpu_custom_call.1} parent=5 // pred_check
        %p1358 = pneg %p1357
      $region54: #{tpu_custom_call.1} parent=5 // pred_check_branch
        %1360 = sbr.rel (%p1358) target = $region56
      $region55: #{tpu_custom_call.1} parent=5 // pred_region
        %s1361 = ssub.s32 %s16, 2
        // Predicated region
        $region57: #{tpu_custom_call.1} parent=55 // pred_check
          %p1362 = pneg %p248
        $region58: #{tpu_custom_call.1} parent=55 // pred_check_branch
          %1364 = sbr.rel (%p1362) target = $region60
        $region59: #{tpu_custom_call.1} parent=55 // pred_region
          %s1365 = sand.u32 %s233, 1
          %s1366 = scalar_lea.sflag [#allocation3], %s1365
          %s1367 = sand.u32 %s233, 1
          %s1368 = smul.addr %s1367, 8
          %s1369 = scalar_lea.vmem [#allocation2], %s1368
          %1370 = dma.done %s1366, 128
        $region60: #{tpu_custom_call.1} parent=55 // pred_fallthru
          _
      $region56: #{tpu_custom_call.1} parent=5 // pred_fallthru
        _
    $region6: #{tpu_custom_call.1} parent=1 // loop_footer
      %s20 = sadd.s32 1, %s16
    $region7: #{tpu_custom_call.1} parent=1 // loop_footer_branch
      %15 = sbr.rel target = $region3
    $region8: #{tpu_custom_call.1} parent=1 // loop_exit
      _
    %1371 = vsyncpa [#allocation3], 1
    %s1372 = scalar_lea.sflag [#allocation3], 1
    %1373 = vsyncpa %s1372, 1

</llo_original>
